<compile_context>
chip_gen: v6e
topology: v6e:2x2x1
jax: 0.10.0
libtpu: 0.0.40
codegen_flags: <defaults>
</compile_context>

<pallas_src>
import jax
import jax.numpy as jnp
from jax.experimental import pallas as pl
from jax.experimental.pallas import tpu as pltpu


# ----------------------------- fused FFN kernel -----------------------------

def _ffn_kernel(x_ref, w1_ref, b1_ref, w2_ref, b2_ref, o_ref):
    # x_ref : (TM, d_model)   w1_ref: (d_model, d_ff)   b1_ref: (1, d_ff)
    # w2_ref: (d_ff, d_model) b2_ref: (1, d_model)      o_ref : (TM, d_model)
    # Hidden activation lives only in VMEM temporaries picked by Mosaic; it is
    # fed straight into the second MXU matmul (no explicit scratch round trip).
    h = jnp.maximum(
        jnp.dot(x_ref[...], w1_ref[...], preferred_element_type=jnp.float32)
        + b1_ref[...],
        0.0,
    )
    # TODO(synk): dropout skipped (identity) -- eval-mode forward.
    o_ref[...] = (
        jnp.dot(h, w2_ref[...], preferred_element_type=jnp.float32)
        + b2_ref[...]
    ).astype(o_ref.dtype)


def positionwise_feed_forward(x, w1, b1, w2, b2, *, block_rows=256):
    """Fused w2(relu(w1(x) + b1)) + b2.  x: (..., d_model)."""
    d_model = x.shape[-1]
    d_ff = w1.shape[1]
    assert w1.shape == (d_model, d_ff)
    assert w2.shape == (d_ff, d_model)

    w1 = w1.astype(jnp.float32)
    w2 = w2.astype(jnp.float32)
    b1 = b1.reshape(1, d_ff).astype(jnp.float32)
    b2 = b2.reshape(1, d_model).astype(jnp.float32)

    lead_shape = x.shape[:-1]
    x2 = x.reshape(-1, d_model).astype(jnp.float32)
    n_rows = x2.shape[0]

    # Row tile: >=2 parallel tiles lets Mosaic shard across the two
    # TensorCores on v7x; 256-row tiles fill the 256-wide MXU on v6e/v7x.
    tm = min(block_rows, max(8, n_rows))
    n_pad = pl.cdiv(n_rows, tm) * tm
    if n_pad != n_rows:
        x2 = jnp.pad(x2, ((0, n_pad - n_rows), (0, 0)))
    grid = (n_pad // tm,)

    # Advisory cost: two GEMMs (2*M*K*N flops each) + main HBM traffic.
    flops = 2 * n_pad * d_model * d_ff * 2
    bytes_accessed = 4 * (
        n_pad * d_model * 2            # x in + out
        + d_model * d_ff * 2           # w1 + w2
        + d_ff + d_model               # biases
    )
    cost = pl.CostEstimate(flops=flops, transcendentals=0,
                           bytes_accessed=bytes_accessed)

    out = pl.pallas_call(
        _ffn_kernel,
        out_shape=jax.ShapeDtypeStruct((n_pad, d_model), jnp.float32),
        grid_spec=pltpu.PrefetchScalarGridSpec(
            num_scalar_prefetch=0,
            grid=grid,
            in_specs=[
                pl.BlockSpec((tm, d_model), lambda i: (i, 0)),    # x rows tile
                pl.BlockSpec((d_model, d_ff), lambda i: (0, 0)),  # w1 (whole)
                pl.BlockSpec((1, d_ff), lambda i: (0, 0)),        # b1
                pl.BlockSpec((d_ff, d_model), lambda i: (0, 0)),  # w2 (whole)
                pl.BlockSpec((1, d_model), lambda i: (0, 0)),     # b2
            ],
            out_specs=pl.BlockSpec((tm, d_model), lambda i: (i, 0)),
        ),
        compiler_params=pltpu.CompilerParams(
            dimension_semantics=("parallel",),
        ),
        cost_estimate=cost,
    )(x2, w1, b1, w2, b2)

    if n_pad != n_rows:
        out = out[:n_rows]
    return out.reshape(*lead_shape, d_model)


# ----------------------------- reference (pure JAX) -----------------------------

def ffn_reference(x, w1, b1, w2, b2):
    h = jnp.maximum(x @ w1 + b1.reshape(1, -1), 0.0)
    return h @ w2 + b2.reshape(1, -1)


# ----------------------------- main -----------------------------

if __name__ == "__main__":
    key = jax.random.PRNGKey(0)
    k_x, k_w1, k_b1, k_w2, k_b2 = jax.random.split(key, 5)

    # Module-consistent shapes: x is (batch, seq, d_model); d_ff = 4*d_model.
    B, T, D_MODEL = 2, 256, 128
    D_FF = 4 * D_MODEL

    x = jax.random.normal(k_x, (B, T, D_MODEL), dtype=jnp.float32)
    # nn.Linear-style init: U(-1/sqrt(fan_in), 1/sqrt(fan_in))
    lim1 = 1.0 / (D_MODEL ** 0.5)
    lim2 = 1.0 / (D_FF ** 0.5)
    w1 = jax.random.uniform(k_w1, (D_MODEL, D_FF), jnp.float32, -lim1, lim1)
    b1 = jax.random.uniform(k_b1, (D_FF,), jnp.float32, -lim1, lim1)
    w2 = jax.random.uniform(k_w2, (D_FF, D_MODEL), jnp.float32, -lim2, lim2)
    b2 = jax.random.uniform(k_b2, (D_MODEL,), jnp.float32, -lim2, lim2)

    fused = jax.jit(positionwise_feed_forward)
    out = jax.block_until_ready(fused(x, w1, b1, w2, b2))

    ref = jax.block_until_ready(
        ffn_reference(x.reshape(-1, D_MODEL), w1, b1, w2, b2).reshape(B, T, D_MODEL)
    )

    assert out.shape == (B, T, D_MODEL), out.shape
    assert bool(jnp.all(jnp.isfinite(out)))
    assert bool(jnp.allclose(out, ref, rtol=1e-4, atol=1e-4)), (
        float(jnp.max(jnp.abs(out - ref)))
    )
    print("KERNEL_OK")
</pallas_src>

<mosaic_0001>
module attributes {stable_mosaic.version = 11 : i64} {
  func.func @_ffn_kernel(%arg0: i32, %arg1: memref<256x128xf32, #tpu.memory_space<vmem>>, %arg2: memref<128x512xf32, #tpu.memory_space<vmem>>, %arg3: memref<1x512xf32, #tpu.memory_space<vmem>>, %arg4: memref<512x128xf32, #tpu.memory_space<vmem>>, %arg5: memref<1x128xf32, #tpu.memory_space<vmem>>, %arg6: memref<256x128xf32, #tpu.memory_space<vmem>>) attributes {dimension_semantics = [#tpu.dimension_semantics<parallel>], iteration_bounds = array<i64: 2>, scalar_prefetch = 0 : i64, scratch_operands = 0 : i64, tpu.core_type = #tpu.core_type<tc>, window_params = [{transform_indices = @transform_0, window_bounds = array<i64: 256, 128>}, {pipeline_mode = #tpu.pipeline_mode<synchronous>, transform_indices = @transform_1, window_bounds = array<i64: 128, 512>}, {pipeline_mode = #tpu.pipeline_mode<synchronous>, transform_indices = @transform_2, window_bounds = array<i64: 1, 512>}, {pipeline_mode = #tpu.pipeline_mode<synchronous>, transform_indices = @transform_3, window_bounds = array<i64: 512, 128>}, {pipeline_mode = #tpu.pipeline_mode<synchronous>, transform_indices = @transform_4, window_bounds = array<i64: 1, 128>}, {transform_indices = @transform_5, window_bounds = array<i64: 256, 128>}]} {
    %c0 = arith.constant 0 : index
    %c0_0 = arith.constant 0 : index
    %0 = vector.load %arg1[%c0, %c0_0] : memref<256x128xf32, #tpu.memory_space<vmem>>, vector<256x128xf32>
    %c0_1 = arith.constant 0 : index
    %c0_2 = arith.constant 0 : index
    %1 = vector.load %arg2[%c0_1, %c0_2] : memref<128x512xf32, #tpu.memory_space<vmem>>, vector<128x512xf32>
    %cst = arith.constant dense<0.000000e+00> : vector<256x512xf32>
    %2 = tpu.matmul %0, %1, %cst {dimension_numbers = #tpu.dot_dimension_numbers<[1], [0], [0], [1], [0, 0, 1, 1], [], []>} : vector<256x128xf32>, vector<128x512xf32>, vector<256x512xf32> -> vector<256x512xf32>
    %c0_3 = arith.constant 0 : index
    %c0_4 = arith.constant 0 : index
    %3 = vector.load %arg3[%c0_3, %c0_4] : memref<1x512xf32, #tpu.memory_space<vmem>>, vector<1x512xf32>
    %4 = vector.broadcast %3 : vector<1x512xf32> to vector<256x512xf32>
    %5 = arith.addf %2, %4 : vector<256x512xf32>
    %cst_5 = arith.constant 0.000000e+00 : f32
    %6 = vector.broadcast %cst_5 : f32 to vector<256x512xf32>
    %7 = arith.maximumf %5, %6 : vector<256x512xf32>
    %c0_6 = arith.constant 0 : index
    %c0_7 = arith.constant 0 : index
    %8 = vector.load %arg4[%c0_6, %c0_7] : memref<512x128xf32, #tpu.memory_space<vmem>>, vector<512x128xf32>
    %cst_8 = arith.constant dense<0.000000e+00> : vector<256x128xf32>
    %9 = tpu.matmul %7, %8, %cst_8 {dimension_numbers = #tpu.dot_dimension_numbers<[1], [0], [0], [1], [0, 0, 1, 1], [], []>} : vector<256x512xf32>, vector<512x128xf32>, vector<256x128xf32> -> vector<256x128xf32>
    %c0_9 = arith.constant 0 : index
    %c0_10 = arith.constant 0 : index
    %10 = vector.load %arg5[%c0_9, %c0_10] : memref<1x128xf32, #tpu.memory_space<vmem>>, vector<1x128xf32>
    %11 = vector.broadcast %10 : vector<1x128xf32> to vector<256x128xf32>
    %12 = arith.addf %9, %11 : vector<256x128xf32>
    %c0_11 = arith.constant 0 : index
    %c0_12 = arith.constant 0 : index
    %13 = vector.load %arg6[%c0_11, %c0_12] : memref<256x128xf32, #tpu.memory_space<vmem>>, vector<256x128xf32>
    tpu.vector_store %arg6[%c0_11, %c0_12], %12 {strides = array<i32>} : memref<256x128xf32, #tpu.memory_space<vmem>>, vector<256x128xf32>,
    return
  }
  func.func @transform_0(%arg0: i32) -> (i32, i32) {
    %c0_i32 = arith.constant 0 : i32
    %c0_i32_0 = arith.constant 0 : i32
    return %arg0, %c0_i32 : i32, i32
  }
  func.func @transform_1(%arg0: i32) -> (i32, i32) {
    %c0_i32 = arith.constant 0 : i32
    %c0_i32_0 = arith.constant 0 : i32
    %c0_i32_1 = arith.constant 0 : i32
    return %c0_i32, %c0_i32_0 : i32, i32
  }
  func.func @transform_2(%arg0: i32) -> (i32, i32) {
    %c0_i32 = arith.constant 0 : i32
    %c0_i32_0 = arith.constant 0 : i32
    %c0_i32_1 = arith.constant 0 : i32
    return %c0_i32, %c0_i32_0 : i32, i32
  }
  func.func @transform_3(%arg0: i32) -> (i32, i32) {
    %c0_i32 = arith.constant 0 : i32
    %c0_i32_0 = arith.constant 0 : i32
    %c0_i32_1 = arith.constant 0 : i32
    return %c0_i32, %c0_i32_0 : i32, i32
  }
  func.func @transform_4(%arg0: i32) -> (i32, i32) {
    %c0_i32 = arith.constant 0 : i32
    %c0_i32_0 = arith.constant 0 : i32
    %c0_i32_1 = arith.constant 0 : i32
    return %c0_i32, %c0_i32_0 : i32, i32
  }
  func.func @transform_5(%arg0: i32) -> (i32, i32) {
    %c0_i32 = arith.constant 0 : i32
    %c0_i32_0 = arith.constant 0 : i32
    return %arg0, %c0_i32 : i32, i32
  }
}

</mosaic_0001>

<llo_original>
// kernel: positionwise_feed_forward.1
$region0: #{positionwise_feed_forward.1}
  #allocation0 [shape = 'u32[]', space=smem, size = 0x4, offset = 0x4, fixed_abs, tag = 'smem constant byte address 0x4 - core index']
  #allocation1 [shape = 'u32[144,128]{1,0:T(1,128)}', space=vmem, size = 0x12000, scoped, tag = 'internal scratch']
  %s0 = inlined_call_operand.hbm [shape: f32[512,128], index: 0, kind: input, shape index: {}]
  %s1 = inlined_call_operand.hbm [shape: f32[128,512], index: 1, kind: input, shape index: {}]
  %s2 = inlined_call_operand.vmem [shape: f32[1,512], index: 2, kind: input, shape index: {}]
  %s3 = inlined_call_operand.hbm [shape: f32[512,128], index: 3, kind: input, shape index: {}]
  %s4 = inlined_call_operand.vmem [shape: f32[1,128], index: 4, kind: input, shape index: {}]
  %s5 = inlined_call_operand.hbm [shape: f32[512,128], index: 5, kind: output, shape index: {}]
  %s6 = sld [smem:[#allocation0]]
  $region65: #{positionwise_feed_forward.1} parent=0
    _
  %s8 = ssub.s32 1, %s6
  %s9 = scalar_select 0, %s8, %s6
  $region1: #{positionwise_feed_forward.1} parent=0
    #allocation2 [shape = 'u8[262144]{0}', space=vmem, size = 0x40000, scoped, tag = 'input window, operand 0']
    #allocation3 [shape = 's32[2]{0}', space=sflag, size = 0x8, scoped, tag = 'scoped memory for positionwise_feed_forward.1']
    #allocation4 [shape = 's32[2]{0}', space=sflag, size = 0x8, scoped, tag = 'scoped memory for positionwise_feed_forward.1']
    #allocation5 [shape = 'u8[262144]{0}', space=vmem, size = 0x40000, scoped, tag = 'input window, operand 1, single buffered']
    #allocation6 [shape = 's32[1]{0}', space=sflag, size = 0x4, scoped, tag = 'scoped memory for positionwise_feed_forward.1']
    #allocation7 [shape = 'u8[262144]{0}', space=vmem, size = 0x40000, scoped, tag = 'input window, operand 3, single buffered']
    #allocation8 [shape = 'u8[262144]{0}', space=vmem, size = 0x40000, scoped, tag = 'output window, operand 0']
    %10 = vsyncpa [#allocation3], 0
    %s11 = scalar_lea.sflag [#allocation3], 1
    %12 = vsyncpa %s11, 0
    %13 = vsyncpa [#allocation6], 0
    %14 = vsyncpa [#allocation4], 0
    %s15 = scalar_lea.sflag [#allocation4], 1
    %16 = vsyncpa %s15, 0
    loop: start=0, step=1, limit=4
    $region2: #{positionwise_feed_forward.1} parent=1 // loop_pre_header
      _
    $region3: #{positionwise_feed_forward.1} parent=1 // loop_header
      %s18 = sphi 0, %s22
      %p19 = scmp.ge.s32.totalorder %s18, 4
      %s28 = sphi 0, %s30
      %s31 = sphi 0, %s28
      %s32 = sphi 0, %s31
      %s48 = sphi 0, %s32
      %s52 = sphi 0, %s52
      %s54 = sphi 0, %s52
      %s55 = sphi 0, %s54
      %s69 = sphi 0, %s55
      %s73 = sphi 0, %s73
      %s75 = sphi 0, %s73
      %s76 = sphi 0, %s75
      %s90 = sphi 0, %s76
      %s94 = sphi 0, %s94
      %s96 = sphi 0, %s94
      %s97 = sphi 0, %s96
      %s111 = sphi 0, %s97
      %s115 = sphi 0, %s115
      %s117 = sphi 0, %s115
      %s118 = sphi 0, %s117
      %s132 = sphi 0, %s118
      %s138 = sphi 0, %s140
      %s141 = sphi 0, %s138
      %s142 = sphi 0, %s141
      %s158 = sphi 0, %s142
    $region4: #{positionwise_feed_forward.1} parent=1 // loop_header_branch
      %21 = sbr.rel (%p19) target = $region8
    $region5: #{positionwise_feed_forward.1} parent=1 // loop_body
      %s23 = ssub.s32 %s18, 1
      %s24 = ssub.s32 %s18, 2
      %s25 = sadd.s32 %s18, 1
      %s26 = ssub.s32 %s18, %s25
      %p27 = scmp.eq.s32.totalorder %s26, 0
      %s29 = sadd.s32 %s28, 1
      %s30 = scalar_select %p27, %s28, %s29
      %p33 = pneg %p27
      %p34 = scmp.eq.s32.totalorder %s18, 1
      %p35 = por %p33, %p34
      %p36 = scmp.ne.s32.totalorder %s28, %s31
      %p37 = scmp.eq.s32.totalorder %s18, 0
      %p38 = por %p36, %p37
      %p39 = scmp.ne.s32.totalorder %s28, %s31
      %p40 = scmp.eq.s32.totalorder %s23, 1
      %p41 = por %p39, %p40
      %p42 = scmp.ne.s32.totalorder %s31, %s32
      %p43 = scmp.eq.s32.totalorder %s23, 0
      %p44 = por %p42, %p43
      %p45 = scmp.ne.s32.totalorder %s31, %s32
      %p46 = scmp.eq.s32.totalorder %s24, 1
      %p47 = por %p45, %p46
      %p49 = scmp.ne.s32.totalorder %s32, %s48
      %p50 = scmp.eq.s32.totalorder %s24, 0
      %p51 = por %p49, %p50
      %s53 = sadd.s32 %s52, 1
      %p56 = scmp.eq.s32.totalorder %s18, 1
      %p57 = scmp.ne.s32.totalorder %s52, %s54
      %p58 = scmp.eq.s32.totalorder %s18, 0
      %p59 = por %p57, %p58
      %p60 = scmp.ne.s32.totalorder %s52, %s54
      %p61 = scmp.eq.s32.totalorder %s23, 1
      %p62 = por %p60, %p61
      %p63 = scmp.ne.s32.totalorder %s54, %s55
      %p64 = scmp.eq.s32.totalorder %s23, 0
      %p65 = por %p63, %p64
      %p66 = scmp.ne.s32.totalorder %s54, %s55
      %p67 = scmp.eq.s32.totalorder %s24, 1
      %p68 = por %p66, %p67
      %p70 = scmp.ne.s32.totalorder %s55, %s69
      %p71 = scmp.eq.s32.totalorder %s24, 0
      %p72 = por %p70, %p71
      %s74 = sadd.s32 %s73, 1
      %p77 = scmp.eq.s32.totalorder %s18, 1
      %p78 = scmp.ne.s32.totalorder %s73, %s75
      %p79 = scmp.eq.s32.totalorder %s18, 0
      %p80 = por %p78, %p79
      %p81 = scmp.ne.s32.totalorder %s73, %s75
      %p82 = scmp.eq.s32.totalorder %s23, 1
      %p83 = por %p81, %p82
      %p84 = scmp.ne.s32.totalorder %s75, %s76
      %p85 = scmp.eq.s32.totalorder %s23, 0
      %p86 = por %p84, %p85
      %p87 = scmp.ne.s32.totalorder %s75, %s76
      %p88 = scmp.eq.s32.totalorder %s24, 1
      %p89 = por %p87, %p88
      %p91 = scmp.ne.s32.totalorder %s76, %s90
      %p92 = scmp.eq.s32.totalorder %s24, 0
      %p93 = por %p91, %p92
      %s95 = sadd.s32 %s94, 1
      %p98 = scmp.eq.s32.totalorder %s18, 1
      %p99 = scmp.ne.s32.totalorder %s94, %s96
      %p100 = scmp.eq.s32.totalorder %s18, 0
      %p101 = por %p99, %p100
      %p102 = scmp.ne.s32.totalorder %s94, %s96
      %p103 = scmp.eq.s32.totalorder %s23, 1
      %p104 = por %p102, %p103
      %p105 = scmp.ne.s32.totalorder %s96, %s97
      %p106 = scmp.eq.s32.totalorder %s23, 0
      %p107 = por %p105, %p106
      %p108 = scmp.ne.s32.totalorder %s96, %s97
      %p109 = scmp.eq.s32.totalorder %s24, 1
      %p110 = por %p108, %p109
      %p112 = scmp.ne.s32.totalorder %s97, %s111
      %p113 = scmp.eq.s32.totalorder %s24, 0
      %p114 = por %p112, %p113
      %s116 = sadd.s32 %s115, 1
      %p119 = scmp.eq.s32.totalorder %s18, 1
      %p120 = scmp.ne.s32.totalorder %s115, %s117
      %p121 = scmp.eq.s32.totalorder %s18, 0
      %p122 = por %p120, %p121
      %p123 = scmp.ne.s32.totalorder %s115, %s117
      %p124 = scmp.eq.s32.totalorder %s23, 1
      %p125 = por %p123, %p124
      %p126 = scmp.ne.s32.totalorder %s117, %s118
      %p127 = scmp.eq.s32.totalorder %s23, 0
      %p128 = por %p126, %p127
      %p129 = scmp.ne.s32.totalorder %s117, %s118
      %p130 = scmp.eq.s32.totalorder %s24, 1
      %p131 = por %p129, %p130
      %p133 = scmp.ne.s32.totalorder %s118, %s132
      %p134 = scmp.eq.s32.totalorder %s24, 0
      %p135 = por %p133, %p134
      %s136 = ssub.s32 %s18, %s25
      %p137 = scmp.eq.s32.totalorder %s136, 0
      %s139 = sadd.s32 %s138, 1
      %s140 = scalar_select %p137, %s138, %s139
      %p143 = pneg %p137
      %p144 = scmp.eq.s32.totalorder %s18, 1
      %p145 = por %p143, %p144
      %p146 = scmp.ne.s32.totalorder %s138, %s141
      %p147 = scmp.eq.s32.totalorder %s18, 0
      %p148 = por %p146, %p147
      %p149 = scmp.ne.s32.totalorder %s138, %s141
      %p150 = scmp.eq.s32.totalorder %s23, 1
      %p151 = por %p149, %p150
      %p152 = scmp.ne.s32.totalorder %s141, %s142
      %p153 = scmp.eq.s32.totalorder %s23, 0
      %p154 = por %p152, %p153
      %p155 = scmp.ne.s32.totalorder %s141, %s142
      %p156 = scmp.eq.s32.totalorder %s24, 1
      %p157 = por %p155, %p156
      %p159 = scmp.ne.s32.totalorder %s142, %s158
      %p160 = scmp.eq.s32.totalorder %s24, 0
      %p161 = por %p159, %p160
      %p162 = scmp.le.s32.totalorder 1, %s18
      %p163 = scmp.lt.s32.totalorder %s18, 3
      %p164 = pnand %p162, %p163
      %p165 = pneg %p164
      // Predicated region
      $region9: #{positionwise_feed_forward.1} parent=5 // pred_check
        _
      $region10: #{positionwise_feed_forward.1} parent=5 // pred_check_branch
        %167 = sbr.rel (%p164) target = $region12
      $region11: #{positionwise_feed_forward.1} parent=5 // pred_region
        %s168 = ssub.s32 %s18, 1
        // Predicated region
        $region13: #{positionwise_feed_forward.1} parent=11 // pred_check
          %p169 = pneg %p65
        $region14: #{positionwise_feed_forward.1} parent=11 // pred_check_branch
          %171 = sbr.rel (%p169) target = $region16
        $region15: #{positionwise_feed_forward.1} parent=11 // pred_region
          %s173 = ssub.s32 8192, 8192
          %174 = vsyncadd [#allocation6], %s173
          %s175 = sshll.u32 [#allocation5], 4
          %s176 = int_to_ptr.vmem [resolvable:$true] %s175
          %181 = dma.hbm_to_vmem [thread:$0]  %s1, 8192, %s176, [#allocation6], 512, 512, 32
        $region16: #{positionwise_feed_forward.1} parent=11 // pred_fallthru
          _
        // Predicated region
        $region17: #{positionwise_feed_forward.1} parent=11 // pred_check
          %p182 = pneg %p86
        $region18: #{positionwise_feed_forward.1} parent=11 // pred_check_branch
          %184 = sbr.rel (%p182) target = $region20
        $region19: #{positionwise_feed_forward.1} parent=11 // pred_region
          _
        $region20: #{positionwise_feed_forward.1} parent=11 // pred_fallthru
          _
        // Predicated region
        $region21: #{positionwise_feed_forward.1} parent=11 // pred_check
          %p185 = pneg %p107
        $region22: #{positionwise_feed_forward.1} parent=11 // pred_check_branch
          %187 = sbr.rel (%p185) target = $region24
        $region23: #{positionwise_feed_forward.1} parent=11 // pred_region
          %s189 = ssub.s32 8192, 8192
          %190 = vsyncadd [#allocation6], %s189
          %s191 = sshll.u32 [#allocation7], 4
          %s192 = int_to_ptr.vmem [resolvable:$true] %s191
          %197 = dma.hbm_to_vmem [thread:$0]  %s3, 8192, %s192, [#allocation6], 128, 128, 8
        $region24: #{positionwise_feed_forward.1} parent=11 // pred_fallthru
          _
        // Predicated region
        $region25: #{positionwise_feed_forward.1} parent=11 // pred_check
          %p198 = pneg %p128
        $region26: #{positionwise_feed_forward.1} parent=11 // pred_check_branch
          %200 = sbr.rel (%p198) target = $region28
        $region27: #{positionwise_feed_forward.1} parent=11 // pred_region
          _
        $region28: #{positionwise_feed_forward.1} parent=11 // pred_fallthru
          _
      $region12: #{positionwise_feed_forward.1} parent=5 // pred_fallthru
        _
      %p201 = scmp.lt.s32.totalorder %s18, 2
      // Predicated region
      $region29: #{positionwise_feed_forward.1} parent=5 // pred_check
        %p202 = pneg %p201
      $region30: #{positionwise_feed_forward.1} parent=5 // pred_check_branch
        %204 = sbr.rel (%p202) target = $region32
      $region31: #{positionwise_feed_forward.1} parent=5 // pred_region
        // Predicated region
        $region33: #{positionwise_feed_forward.1} parent=31 // pred_check
          %p205 = pneg %p38
        $region34: #{positionwise_feed_forward.1} parent=31 // pred_check_branch
          %207 = sbr.rel (%p205) target = $region36
        $region35: #{positionwise_feed_forward.1} parent=31 // pred_region
          %s208 = sand.u32 %s28, 1
          %s209 = scalar_lea.sflag [#allocation3], %s208
          %s210 = sand.u32 %s28, 1
          %s211 = smul.addr %s210, 256
          %s212 = scalar_lea.vmem [#allocation2], %s211
          %s213 = smul.u32 32, %s18
          %s215 = ssub.s32 4096, 4096
          %216 = vsyncadd %s209, %s215
          %s217 = smul.addr %s213, 128
          %s218 = scalar_lea.hbm %s0, %s217
          %s219 = sshll.u32 %s212, 4
          %s220 = int_to_ptr.vmem [resolvable:$true] %s219
          %225 = dma.hbm_to_vmem [thread:$0]  %s218, 4096, %s220, %s209, 128, 128, 8
        $region36: #{positionwise_feed_forward.1} parent=31 // pred_fallthru
          _
      $region32: #{positionwise_feed_forward.1} parent=5 // pred_fallthru
        _
      %p226 = scmp.le.s32.totalorder 1, %s18
      %p227 = scmp.lt.s32.totalorder %s18, 3
      %p228 = pnand %p226, %p227
      %p229 = pneg %p228
      // Predicated region
      $region37: #{positionwise_feed_forward.1} parent=5 // pred_check
        _
      $region38: #{positionwise_feed_forward.1} parent=5 // pred_check_branch
        %231 = sbr.rel (%p228) target = $region40
      $region39: #{positionwise_feed_forward.1} parent=5 // pred_region
        %s232 = ssub.s32 %s18, 1
        %s233 = sand.u32 %s31, 1
        %s234 = scalar_lea.sflag [#allocation3], %s233
        %s235 = sand.u32 %s31, 1
        %s236 = smul.addr %s235, 256
        %s237 = scalar_lea.vmem [#allocation2], %s236
        // Predicated region
        $region41: #{positionwise_feed_forward.1} parent=39 // pred_check
          %p238 = pneg %p44
        $region42: #{positionwise_feed_forward.1} parent=39 // pred_check_branch
          %240 = sbr.rel (%p238) target = $region44
        $region43: #{positionwise_feed_forward.1} parent=39 // pred_region
          %241 = dma.done %s234, 4096
        $region44: #{positionwise_feed_forward.1} parent=39 // pred_fallthru
          _
        // Predicated region
        $region45: #{positionwise_feed_forward.1} parent=39 // pred_check
          %p242 = pneg %p65
        $region46: #{positionwise_feed_forward.1} parent=39 // pred_check_branch
          %244 = sbr.rel (%p242) target = $region48
        $region47: #{positionwise_feed_forward.1} parent=39 // pred_region
          %245 = dma.done [#allocation6], 8192
        $region48: #{positionwise_feed_forward.1} parent=39 // pred_fallthru
          _
        // Predicated region
        $region49: #{positionwise_feed_forward.1} parent=39 // pred_check
          %p246 = pneg %p107
        $region50: #{positionwise_feed_forward.1} parent=39 // pred_check_branch
          %248 = sbr.rel (%p246) target = $region52
        $region51: #{positionwise_feed_forward.1} parent=39 // pred_region
          %249 = dma.done [#allocation6], 8192
        $region52: #{positionwise_feed_forward.1} parent=39 // pred_fallthru
          _
        %s250 = sand.u32 %s31, 1
        %s251 = scalar_lea.sflag [#allocation3], %s250
        %s252 = sand.u32 %s31, 1
        %s253 = smul.addr %s252, 256
        %s254 = scalar_lea.vmem [#allocation2], %s253
        %p255 = pneg %p44
        %p256 = pneg %p41
        %p257 = pneg %p65
        %p258 = pneg %p62
        %p259 = pneg %p86
        %p260 = pneg %p83
        %p261 = pneg %p107
        %p262 = pneg %p104
        %p263 = pneg %p128
        %p264 = pneg %p125
        %p265 = pneg %p154
        %p266 = pneg %p151
        %s267 = sand.u32 %s141, 1
        %s268 = scalar_lea.sflag [#allocation4], %s267
        %s269 = sand.u32 %s141, 1
        %s270 = smul.addr %s269, 256
        %s271 = scalar_lea.vmem [#allocation8], %s270
        %s272 = smul.u32 32, %s23
        %s273 = smul.u32 32, %s23
        %v274 = vld [vmem:[%s237] sm:$0xff]
        %v275 = vld [vmem:[%s237 + $0x8] sm:$0xff]
        %v276 = vld [vmem:[%s237 + $0x10] sm:$0xff]
        %v277 = vld [vmem:[%s237 + $0x18] sm:$0xff]
        %v278 = vld [vmem:[%s237 + $0x20] sm:$0xff]
        %v279 = vld [vmem:[%s237 + $0x28] sm:$0xff]
        %v280 = vld [vmem:[%s237 + $0x30] sm:$0xff]
        %v281 = vld [vmem:[%s237 + $0x38] sm:$0xff]
        %v282 = vld [vmem:[%s237 + $0x40] sm:$0xff]
        %v283 = vld [vmem:[%s237 + $0x48] sm:$0xff]
        %v284 = vld [vmem:[%s237 + $0x50] sm:$0xff]
        %v285 = vld [vmem:[%s237 + $0x58] sm:$0xff]
        %v286 = vld [vmem:[%s237 + $0x60] sm:$0xff]
        %v287 = vld [vmem:[%s237 + $0x68] sm:$0xff]
        %v288 = vld [vmem:[%s237 + $0x70] sm:$0xff]
        %v289 = vld [vmem:[%s237 + $0x78] sm:$0xff]
        %v290 = vld [vmem:[%s237 + $0x80] sm:$0xff]
        %v291 = vld [vmem:[%s237 + $0x88] sm:$0xff]
        %v292 = vld [vmem:[%s237 + $0x90] sm:$0xff]
        %v293 = vld [vmem:[%s237 + $0x98] sm:$0xff]
        %v294 = vld [vmem:[%s237 + $0xa0] sm:$0xff]
        %v295 = vld [vmem:[%s237 + $0xa8] sm:$0xff]
        %v296 = vld [vmem:[%s237 + $0xb0] sm:$0xff]
        %v297 = vld [vmem:[%s237 + $0xb8] sm:$0xff]
        %v298 = vld [vmem:[%s237 + $0xc0] sm:$0xff]
        %v299 = vld [vmem:[%s237 + $0xc8] sm:$0xff]
        %v300 = vld [vmem:[%s237 + $0xd0] sm:$0xff]
        %v301 = vld [vmem:[%s237 + $0xd8] sm:$0xff]
        %v302 = vld [vmem:[%s237 + $0xe0] sm:$0xff]
        %v303 = vld [vmem:[%s237 + $0xe8] sm:$0xff]
        %v304 = vld [vmem:[%s237 + $0xf0] sm:$0xff]
        %v305 = vld [vmem:[%s237 + $0xf8] sm:$0xff]
        %v306 = vld [vmem:[#allocation5] sm:$0xff]
        %v307 = vld [vmem:[#allocation5 + $0x8] sm:$0xff]
        %v308 = vld [vmem:[#allocation5 + $0x10] sm:$0xff]
        %v309 = vld [vmem:[#allocation5 + $0x18] sm:$0xff]
        %v310 = vld [vmem:[#allocation5 + $0x20] sm:$0xff]
        %v311 = vld [vmem:[#allocation5 + $0x28] sm:$0xff]
        %v312 = vld [vmem:[#allocation5 + $0x30] sm:$0xff]
        %v313 = vld [vmem:[#allocation5 + $0x38] sm:$0xff]
        %v314 = vld [vmem:[#allocation5 + $0x40] sm:$0xff]
        %v315 = vld [vmem:[#allocation5 + $0x48] sm:$0xff]
        %v316 = vld [vmem:[#allocation5 + $0x50] sm:$0xff]
        %v317 = vld [vmem:[#allocation5 + $0x58] sm:$0xff]
        %v318 = vld [vmem:[#allocation5 + $0x60] sm:$0xff]
        %v319 = vld [vmem:[#allocation5 + $0x68] sm:$0xff]
        %v320 = vld [vmem:[#allocation5 + $0x70] sm:$0xff]
        %v321 = vld [vmem:[#allocation5 + $0x78] sm:$0xff]
        %v322 = vld [vmem:[#allocation5 + $0x80] sm:$0xff]
        %v323 = vld [vmem:[#allocation5 + $0x88] sm:$0xff]
        %v324 = vld [vmem:[#allocation5 + $0x90] sm:$0xff]
        %v325 = vld [vmem:[#allocation5 + $0x98] sm:$0xff]
        %v326 = vld [vmem:[#allocation5 + $0xa0] sm:$0xff]
        %v327 = vld [vmem:[#allocation5 + $0xa8] sm:$0xff]
        %v328 = vld [vmem:[#allocation5 + $0xb0] sm:$0xff]
        %v329 = vld [vmem:[#allocation5 + $0xb8] sm:$0xff]
        %v330 = vld [vmem:[#allocation5 + $0xc0] sm:$0xff]
        %v331 = vld [vmem:[#allocation5 + $0xc8] sm:$0xff]
        %v332 = vld [vmem:[#allocation5 + $0xd0] sm:$0xff]
        %v333 = vld [vmem:[#allocation5 + $0xd8] sm:$0xff]
        %v334 = vld [vmem:[#allocation5 + $0xe0] sm:$0xff]
        %v335 = vld [vmem:[#allocation5 + $0xe8] sm:$0xff]
        %v336 = vld [vmem:[#allocation5 + $0xf0] sm:$0xff]
        %v337 = vld [vmem:[#allocation5 + $0xf8] sm:$0xff]
        %v338 = vld [vmem:[#allocation5 + $0x100] sm:$0xff]
        %v339 = vld [vmem:[#allocation5 + $0x108] sm:$0xff]
        %v340 = vld [vmem:[#allocation5 + $0x110] sm:$0xff]
        %v341 = vld [vmem:[#allocation5 + $0x118] sm:$0xff]
        %v342 = vld [vmem:[#allocation5 + $0x120] sm:$0xff]
        %v343 = vld [vmem:[#allocation5 + $0x128] sm:$0xff]
        %v344 = vld [vmem:[#allocation5 + $0x130] sm:$0xff]
        %v345 = vld [vmem:[#allocation5 + $0x138] sm:$0xff]
        %v346 = vld [vmem:[#allocation5 + $0x140] sm:$0xff]
        %v347 = vld [vmem:[#allocation5 + $0x148] sm:$0xff]
        %v348 = vld [vmem:[#allocation5 + $0x150] sm:$0xff]
        %v349 = vld [vmem:[#allocation5 + $0x158] sm:$0xff]
        %v350 = vld [vmem:[#allocation5 + $0x160] sm:$0xff]
        %v351 = vld [vmem:[#allocation5 + $0x168] sm:$0xff]
        %v352 = vld [vmem:[#allocation5 + $0x170] sm:$0xff]
        %v353 = vld [vmem:[#allocation5 + $0x178] sm:$0xff]
        %v354 = vld [vmem:[#allocation5 + $0x180] sm:$0xff]
        %v355 = vld [vmem:[#allocation5 + $0x188] sm:$0xff]
        %v356 = vld [vmem:[#allocation5 + $0x190] sm:$0xff]
        %v357 = vld [vmem:[#allocation5 + $0x198] sm:$0xff]
        %v358 = vld [vmem:[#allocation5 + $0x1a0] sm:$0xff]
        %v359 = vld [vmem:[#allocation5 + $0x1a8] sm:$0xff]
        %v360 = vld [vmem:[#allocation5 + $0x1b0] sm:$0xff]
        %v361 = vld [vmem:[#allocation5 + $0x1b8] sm:$0xff]
        %v362 = vld [vmem:[#allocation5 + $0x1c0] sm:$0xff]
        %v363 = vld [vmem:[#allocation5 + $0x1c8] sm:$0xff]
        %v364 = vld [vmem:[#allocation5 + $0x1d0] sm:$0xff]
        %v365 = vld [vmem:[#allocation5 + $0x1d8] sm:$0xff]
        %v366 = vld [vmem:[#allocation5 + $0x1e0] sm:$0xff]
        %v367 = vld [vmem:[#allocation5 + $0x1e8] sm:$0xff]
        %v368 = vld [vmem:[#allocation5 + $0x1f0] sm:$0xff]
        %v369 = vld [vmem:[#allocation5 + $0x1f8] sm:$0xff]
        %v370 = vld [vmem:[%s2] sm:$0xf]
        %v372 = vlaneseq
        %v373 = vshrl.u32 %v372, 7
        %v374 = vsub.s32 0, %v373
        %v375 = vrot.slane %v370, %v374
        %v376 = vlaneseq
        %v377 = vshrl.u32 %v376, 7
        %v378 = vsub.s32 1, %v377
        %v379 = vrot.slane %v370, %v378
        %v380 = vlaneseq
        %v381 = vshrl.u32 %v380, 7
        %v382 = vsub.s32 2, %v381
        %v383 = vrot.slane %v370, %v382
        %v384 = vlaneseq
        %v385 = vshrl.u32 %v384, 7
        %v386 = vsub.s32 3, %v385
        %v387 = vrot.slane %v370, %v386
        %392 = vmatprep.subr.mxu0 %v367
        %393 = vmatpush1.msra.mxu0 %v366
        %394 = vmatprep.subr.mxu0 %v363
        %395 = vmatpush1.msra.mxu0 %v362
        %396 = vmatprep.subr.mxu0 %v359
        %397 = vmatpush1.msra.mxu0 %v358
        %398 = vmatprep.subr.mxu0 %v355
        %399 = vmatpush1.msra.mxu0 %v354
        %400 = vmatprep.subr.mxu0 %v351
        %401 = vmatpush1.msra.mxu0 %v350
        %402 = vmatprep.subr.mxu0 %v347
        %403 = vmatpush1.msra.mxu0 %v346
        %404 = vmatprep.subr.mxu0 %v343
        %405 = vmatpush1.msra.mxu0 %v342
        %406 = vmatprep.subr.mxu0 %v339
        %407 = vmatpush1.msra.mxu0 %v338
        %408 = vmatprep.subr.mxu0 %v335
        %409 = vmatpush1.msra.mxu0 %v334
        %410 = vmatprep.subr.mxu0 %v331
        %411 = vmatpush1.msra.mxu0 %v330
        %412 = vmatprep.subr.mxu0 %v327
        %413 = vmatpush1.msra.mxu0 %v326
        %414 = vmatprep.subr.mxu0 %v323
        %415 = vmatpush1.msra.mxu0 %v322
        %416 = vmatprep.subr.mxu0 %v319
        %417 = vmatpush1.msra.mxu0 %v318
        %418 = vmatprep.subr.mxu0 %v315
        %419 = vmatpush1.msra.mxu0 %v314
        %420 = vmatprep.subr.mxu0 %v311
        %421 = vmatpush1.msra.mxu0 %v310
        %422 = vmatprep.subr.mxu0 %v307
        %423 = vmatpush1.msra.mxu0 %v306
        %424 = vmatprep.subr.mxu0 0.0
        %425 = vmatpush2.msra.mxu0 0.0
        %426 = vmatprep.subr.mxu0 0.0
        %427 = vmatpush2.msra.mxu0 0.0
        %428 = vmatprep.subr.mxu0 0.0
        %429 = vmatpush2.msra.mxu0 0.0
        %430 = vmatprep.subr.mxu0 0.0
        %431 = vmatpush2.msra.mxu0 0.0
        %432 = vmatprep.subr.mxu0 0.0
        %433 = vmatpush2.msra.mxu0 0.0
        %434 = vmatprep.subr.mxu0 0.0
        %435 = vmatpush2.msra.mxu0 0.0
        %436 = vmatprep.subr.mxu0 0.0
        %437 = vmatpush2.msra.mxu0 0.0
        %438 = vmatprep.subr.mxu0 0.0
        %439 = vmatpush2.msra.mxu0 0.0
        %440 = vmatprep.subr.mxu0 0.0
        %441 = vmatpush2.msra.mxu0 0.0
        %442 = vmatprep.subr.mxu0 0.0
        %443 = vmatpush2.msra.mxu0 0.0
        %444 = vmatprep.subr.mxu0 0.0
        %445 = vmatpush2.msra.mxu0 0.0
        %446 = vmatprep.subr.mxu0 0.0
        %447 = vmatpush2.msra.mxu0 0.0
        %448 = vmatprep.subr.mxu0 0.0
        %449 = vmatpush2.msra.mxu0 0.0
        %450 = vmatprep.subr.mxu0 0.0
        %451 = vmatpush2.msra.mxu0 0.0
        %452 = vmatprep.subr.mxu0 0.0
        %453 = vmatpush2.msra.mxu0 0.0
        %454 = vmatprep.subr.mxu0 0.0
        %455 = vmatpush2.msra.mxu0 0.0
        %456 = vmatprep.mubr.f32.mxu0 0.0
        %457 = vmatmul.mubr.f32.gmra.mxu0 %v274
        %v458 = vpop.f32.mrf.mxu0
        %v459 = vadd.f32 %v375, %v458
        %v460 = vpop.f32.mrf.mxu0
        %v461 = vadd.f32 %v379, %v460
        %462 = vmatprep.mubr.f32.mxu0 0.0
        %463 = vmatmul.mubr.f32.gmra.mxu0 %v275
        %v464 = vpop.f32.mrf.mxu0
        %v465 = vadd.f32 %v375, %v464
        %v466 = vpop.f32.mrf.mxu0
        %v467 = vadd.f32 %v379, %v466
        %468 = vmatprep.mubr.f32.mxu0 0.0
        %469 = vmatmul.mubr.f32.gmra.mxu0 %v276
        %v470 = vpop.f32.mrf.mxu0
        %v471 = vadd.f32 %v375, %v470
        %v472 = vpop.f32.mrf.mxu0
        %v473 = vadd.f32 %v379, %v472
        %474 = vmatprep.mubr.f32.mxu0 0.0
        %475 = vmatmul.mubr.f32.gmra.mxu0 %v277
        %v476 = vpop.f32.mrf.mxu0
        %v477 = vadd.f32 %v375, %v476
        %v478 = vpop.f32.mrf.mxu0
        %v479 = vadd.f32 %v379, %v478
        %480 = vmatprep.mubr.f32.mxu0 0.0
        %481 = vmatmul.mubr.f32.gmra.mxu0 %v278
        %v482 = vpop.f32.mrf.mxu0
        %v483 = vadd.f32 %v375, %v482
        %v484 = vpop.f32.mrf.mxu0
        %v485 = vadd.f32 %v379, %v484
        %486 = vmatprep.mubr.f32.mxu0 0.0
        %487 = vmatmul.mubr.f32.gmra.mxu0 %v279
        %v488 = vpop.f32.mrf.mxu0
        %v489 = vadd.f32 %v375, %v488
        %v490 = vpop.f32.mrf.mxu0
        %v491 = vadd.f32 %v379, %v490
        %492 = vmatprep.mubr.f32.mxu0 0.0
        %493 = vmatmul.mubr.f32.gmra.mxu0 %v280
        %v494 = vpop.f32.mrf.mxu0
        %v495 = vadd.f32 %v375, %v494
        %v496 = vpop.f32.mrf.mxu0
        %v497 = vadd.f32 %v379, %v496
        %498 = vmatprep.mubr.f32.mxu0 0.0
        %499 = vmatmul.mubr.f32.gmra.mxu0 %v281
        %v500 = vpop.f32.mrf.mxu0
        %v501 = vadd.f32 %v375, %v500
        %v502 = vpop.f32.mrf.mxu0
        %v503 = vadd.f32 %v379, %v502
        %504 = vmatprep.mubr.f32.mxu0 0.0
        %505 = vmatmul.mubr.f32.gmra.mxu0 %v282
        %v506 = vpop.f32.mrf.mxu0
        %v507 = vadd.f32 %v375, %v506
        %v508 = vpop.f32.mrf.mxu0
        %v509 = vadd.f32 %v379, %v508
        %510 = vmatprep.mubr.f32.mxu0 0.0
        %511 = vmatmul.mubr.f32.gmra.mxu0 %v283
        %v512 = vpop.f32.mrf.mxu0
        %v513 = vadd.f32 %v375, %v512
        %v514 = vpop.f32.mrf.mxu0
        %v515 = vadd.f32 %v379, %v514
        %516 = vmatprep.mubr.f32.mxu0 0.0
        %517 = vmatmul.mubr.f32.gmra.mxu0 %v284
        %v518 = vpop.f32.mrf.mxu0
        %v519 = vadd.f32 %v375, %v518
        %v520 = vpop.f32.mrf.mxu0
        %v521 = vadd.f32 %v379, %v520
        %522 = vmatprep.mubr.f32.mxu0 0.0
        %523 = vmatmul.mubr.f32.gmra.mxu0 %v285
        %v524 = vpop.f32.mrf.mxu0
        %v525 = vadd.f32 %v375, %v524
        %v526 = vpop.f32.mrf.mxu0
        %v527 = vadd.f32 %v379, %v526
        %528 = vmatprep.mubr.f32.mxu0 0.0
        %529 = vmatmul.mubr.f32.gmra.mxu0 %v286
        %v530 = vpop.f32.mrf.mxu0
        %v531 = vadd.f32 %v375, %v530
        %v532 = vpop.f32.mrf.mxu0
        %v533 = vadd.f32 %v379, %v532
        %534 = vmatprep.mubr.f32.mxu0 0.0
        %535 = vmatmul.mubr.f32.gmra.mxu0 %v287
        %v536 = vpop.f32.mrf.mxu0
        %v537 = vadd.f32 %v375, %v536
        %v538 = vpop.f32.mrf.mxu0
        %v539 = vadd.f32 %v379, %v538
        %540 = vmatprep.mubr.f32.mxu0 0.0
        %541 = vmatmul.mubr.f32.gmra.mxu0 %v288
        %v542 = vpop.f32.mrf.mxu0
        %v543 = vadd.f32 %v375, %v542
        %v544 = vpop.f32.mrf.mxu0
        %v545 = vadd.f32 %v379, %v544
        %546 = vmatprep.mubr.f32.mxu0 0.0
        %547 = vmatmul.mubr.f32.gmra.mxu0 %v289
        %v548 = vpop.f32.mrf.mxu0
        %v549 = vadd.f32 %v375, %v548
        %v550 = vpop.f32.mrf.mxu0
        %v551 = vadd.f32 %v379, %v550
        %552 = vmatprep.mubr.f32.mxu0 0.0
        %553 = vmatmul.mubr.f32.gmra.mxu0 %v290
        %v554 = vpop.f32.mrf.mxu0
        %v555 = vadd.f32 %v375, %v554
        %v556 = vpop.f32.mrf.mxu0
        %v557 = vadd.f32 %v379, %v556
        %558 = vmatprep.mubr.f32.mxu0 0.0
        %559 = vmatmul.mubr.f32.gmra.mxu0 %v291
        %v560 = vpop.f32.mrf.mxu0
        %v561 = vadd.f32 %v375, %v560
        %v562 = vpop.f32.mrf.mxu0
        %v563 = vadd.f32 %v379, %v562
        %564 = vmatprep.mubr.f32.mxu0 0.0
        %565 = vmatmul.mubr.f32.gmra.mxu0 %v292
        %v566 = vpop.f32.mrf.mxu0
        %v567 = vadd.f32 %v375, %v566
        %v568 = vpop.f32.mrf.mxu0
        %v569 = vadd.f32 %v379, %v568
        %570 = vmatprep.mubr.f32.mxu0 0.0
        %571 = vmatmul.mubr.f32.gmra.mxu0 %v293
        %v572 = vpop.f32.mrf.mxu0
        %v573 = vadd.f32 %v375, %v572
        %v574 = vpop.f32.mrf.mxu0
        %v575 = vadd.f32 %v379, %v574
        %576 = vmatprep.mubr.f32.mxu0 0.0
        %577 = vmatmul.mubr.f32.gmra.mxu0 %v294
        %v578 = vpop.f32.mrf.mxu0
        %v579 = vadd.f32 %v375, %v578
        %v580 = vpop.f32.mrf.mxu0
        %v581 = vadd.f32 %v379, %v580
        %582 = vmatprep.mubr.f32.mxu0 0.0
        %583 = vmatmul.mubr.f32.gmra.mxu0 %v295
        %v584 = vpop.f32.mrf.mxu0
        %v585 = vadd.f32 %v375, %v584
        %v586 = vpop.f32.mrf.mxu0
        %v587 = vadd.f32 %v379, %v586
        %588 = vmatprep.mubr.f32.mxu0 0.0
        %589 = vmatmul.mubr.f32.gmra.mxu0 %v296
        %v590 = vpop.f32.mrf.mxu0
        %v591 = vadd.f32 %v375, %v590
        %v592 = vpop.f32.mrf.mxu0
        %v593 = vadd.f32 %v379, %v592
        %594 = vmatprep.mubr.f32.mxu0 0.0
        %595 = vmatmul.mubr.f32.gmra.mxu0 %v297
        %v596 = vpop.f32.mrf.mxu0
        %v597 = vadd.f32 %v375, %v596
        %v598 = vpop.f32.mrf.mxu0
        %v599 = vadd.f32 %v379, %v598
        %600 = vmatprep.mubr.f32.mxu0 0.0
        %601 = vmatmul.mubr.f32.gmra.mxu0 %v298
        %v602 = vpop.f32.mrf.mxu0
        %v603 = vadd.f32 %v375, %v602
        %v604 = vpop.f32.mrf.mxu0
        %v605 = vadd.f32 %v379, %v604
        %606 = vmatprep.mubr.f32.mxu0 0.0
        %607 = vmatmul.mubr.f32.gmra.mxu0 %v299
        %v608 = vpop.f32.mrf.mxu0
        %v609 = vadd.f32 %v375, %v608
        %v610 = vpop.f32.mrf.mxu0
        %v611 = vadd.f32 %v379, %v610
        %612 = vmatprep.mubr.f32.mxu0 0.0
        %613 = vmatmul.mubr.f32.gmra.mxu0 %v300
        %v614 = vpop.f32.mrf.mxu0
        %v615 = vadd.f32 %v375, %v614
        %v616 = vpop.f32.mrf.mxu0
        %v617 = vadd.f32 %v379, %v616
        %618 = vmatprep.mubr.f32.mxu0 0.0
        %619 = vmatmul.mubr.f32.gmra.mxu0 %v301
        %v620 = vpop.f32.mrf.mxu0
        %v621 = vadd.f32 %v375, %v620
        %v622 = vpop.f32.mrf.mxu0
        %v623 = vadd.f32 %v379, %v622
        %624 = vmatprep.mubr.f32.mxu0 0.0
        %625 = vmatmul.mubr.f32.gmra.mxu0 %v302
        %v626 = vpop.f32.mrf.mxu0
        %v627 = vadd.f32 %v375, %v626
        %v628 = vpop.f32.mrf.mxu0
        %v629 = vadd.f32 %v379, %v628
        %630 = vmatprep.mubr.f32.mxu0 0.0
        %631 = vmatmul.mubr.f32.gmra.mxu0 %v303
        %v632 = vpop.f32.mrf.mxu0
        %v633 = vadd.f32 %v375, %v632
        %v634 = vpop.f32.mrf.mxu0
        %v635 = vadd.f32 %v379, %v634
        %636 = vmatprep.mubr.f32.mxu0 0.0
        %637 = vmatmul.mubr.f32.gmra.mxu0 %v304
        %v638 = vpop.f32.mrf.mxu0
        %v639 = vadd.f32 %v375, %v638
        %v640 = vpop.f32.mrf.mxu0
        %v641 = vadd.f32 %v379, %v640
        %642 = vmatprep.mubr.f32.mxu0 0.0
        %643 = vmatmul.mubr.f32.gmra.mxu0 %v305
        %v644 = vpop.f32.mrf.mxu0
        %v645 = vadd.f32 %v375, %v644
        %v646 = vpop.f32.mrf.mxu0
        %v647 = vadd.f32 %v379, %v646
        %648 = vdwg.mxu0
        %649 = vmatprep.subr.mxu0 %v369
        %650 = vmatpush1.msra.mxu0 %v368
        %651 = vmatprep.subr.mxu0 %v365
        %652 = vmatpush1.msra.mxu0 %v364
        %653 = vmatprep.subr.mxu0 %v361
        %654 = vmatpush1.msra.mxu0 %v360
        %655 = vmatprep.subr.mxu0 %v357
        %656 = vmatpush1.msra.mxu0 %v356
        %657 = vmatprep.subr.mxu0 %v353
        %658 = vmatpush1.msra.mxu0 %v352
        %659 = vmatprep.subr.mxu0 %v349
        %660 = vmatpush1.msra.mxu0 %v348
        %661 = vmatprep.subr.mxu0 %v345
        %662 = vmatpush1.msra.mxu0 %v344
        %663 = vmatprep.subr.mxu0 %v341
        %664 = vmatpush1.msra.mxu0 %v340
        %665 = vmatprep.subr.mxu0 %v337
        %666 = vmatpush1.msra.mxu0 %v336
        %667 = vmatprep.subr.mxu0 %v333
        %668 = vmatpush1.msra.mxu0 %v332
        %669 = vmatprep.subr.mxu0 %v329
        %670 = vmatpush1.msra.mxu0 %v328
        %671 = vmatprep.subr.mxu0 %v325
        %672 = vmatpush1.msra.mxu0 %v324
        %673 = vmatprep.subr.mxu0 %v321
        %674 = vmatpush1.msra.mxu0 %v320
        %675 = vmatprep.subr.mxu0 %v317
        %676 = vmatpush1.msra.mxu0 %v316
        %677 = vmatprep.subr.mxu0 %v313
        %678 = vmatpush1.msra.mxu0 %v312
        %679 = vmatprep.subr.mxu0 %v309
        %680 = vmatpush1.msra.mxu0 %v308
        %681 = vmatprep.subr.mxu0 0.0
        %682 = vmatpush2.msra.mxu0 0.0
        %683 = vmatprep.subr.mxu0 0.0
        %684 = vmatpush2.msra.mxu0 0.0
        %685 = vmatprep.subr.mxu0 0.0
        %686 = vmatpush2.msra.mxu0 0.0
        %687 = vmatprep.subr.mxu0 0.0
        %688 = vmatpush2.msra.mxu0 0.0
        %689 = vmatprep.subr.mxu0 0.0
        %690 = vmatpush2.msra.mxu0 0.0
        %691 = vmatprep.subr.mxu0 0.0
        %692 = vmatpush2.msra.mxu0 0.0
        %693 = vmatprep.subr.mxu0 0.0
        %694 = vmatpush2.msra.mxu0 0.0
        %695 = vmatprep.subr.mxu0 0.0
        %696 = vmatpush2.msra.mxu0 0.0
        %697 = vmatprep.subr.mxu0 0.0
        %698 = vmatpush2.msra.mxu0 0.0
        %699 = vmatprep.subr.mxu0 0.0
        %700 = vmatpush2.msra.mxu0 0.0
        %701 = vmatprep.subr.mxu0 0.0
        %702 = vmatpush2.msra.mxu0 0.0
        %703 = vmatprep.subr.mxu0 0.0
        %704 = vmatpush2.msra.mxu0 0.0
        %705 = vmatprep.subr.mxu0 0.0
        %706 = vmatpush2.msra.mxu0 0.0
        %707 = vmatprep.subr.mxu0 0.0
        %708 = vmatpush2.msra.mxu0 0.0
        %709 = vmatprep.subr.mxu0 0.0
        %710 = vmatpush2.msra.mxu0 0.0
        %711 = vmatprep.subr.mxu0 0.0
        %712 = vmatpush2.msra.mxu0 0.0
        %713 = vmatprep.mubr.f32.mxu0 0.0
        %714 = vmatmul.mubr.f32.gmra.mxu0 %v274
        %v715 = vpop.f32.mrf.mxu0
        %v716 = vadd.f32 %v383, %v715
        %v717 = vpop.f32.mrf.mxu0
        %v718 = vadd.f32 %v387, %v717
        %719 = vmatprep.mubr.f32.mxu0 0.0
        %720 = vmatmul.mubr.f32.gmra.mxu0 %v275
        %v721 = vpop.f32.mrf.mxu0
        %v722 = vadd.f32 %v383, %v721
        %v723 = vpop.f32.mrf.mxu0
        %v724 = vadd.f32 %v387, %v723
        %725 = vmatprep.mubr.f32.mxu0 0.0
        %726 = vmatmul.mubr.f32.gmra.mxu0 %v276
        %v727 = vpop.f32.mrf.mxu0
        %v728 = vadd.f32 %v383, %v727
        %v729 = vpop.f32.mrf.mxu0
        %v730 = vadd.f32 %v387, %v729
        %731 = vmatprep.mubr.f32.mxu0 0.0
        %732 = vmatmul.mubr.f32.gmra.mxu0 %v277
        %v733 = vpop.f32.mrf.mxu0
        %v734 = vadd.f32 %v383, %v733
        %v735 = vpop.f32.mrf.mxu0
        %v736 = vadd.f32 %v387, %v735
        %737 = vmatprep.mubr.f32.mxu0 0.0
        %738 = vmatmul.mubr.f32.gmra.mxu0 %v278
        %v739 = vpop.f32.mrf.mxu0
        %v740 = vadd.f32 %v383, %v739
        %v741 = vpop.f32.mrf.mxu0
        %v742 = vadd.f32 %v387, %v741
        %743 = vmatprep.mubr.f32.mxu0 0.0
        %744 = vmatmul.mubr.f32.gmra.mxu0 %v279
        %v745 = vpop.f32.mrf.mxu0
        %v746 = vadd.f32 %v383, %v745
        %v747 = vpop.f32.mrf.mxu0
        %v748 = vadd.f32 %v387, %v747
        %749 = vmatprep.mubr.f32.mxu0 0.0
        %750 = vmatmul.mubr.f32.gmra.mxu0 %v280
        %v751 = vpop.f32.mrf.mxu0
        %v752 = vadd.f32 %v383, %v751
        %v753 = vpop.f32.mrf.mxu0
        %v754 = vadd.f32 %v387, %v753
        %755 = vmatprep.mubr.f32.mxu0 0.0
        %756 = vmatmul.mubr.f32.gmra.mxu0 %v281
        %v757 = vpop.f32.mrf.mxu0
        %v758 = vadd.f32 %v383, %v757
        %v759 = vpop.f32.mrf.mxu0
        %v760 = vadd.f32 %v387, %v759
        %761 = vmatprep.mubr.f32.mxu0 0.0
        %762 = vmatmul.mubr.f32.gmra.mxu0 %v282
        %v763 = vpop.f32.mrf.mxu0
        %v764 = vadd.f32 %v383, %v763
        %v765 = vpop.f32.mrf.mxu0
        %v766 = vadd.f32 %v387, %v765
        %767 = vmatprep.mubr.f32.mxu0 0.0
        %768 = vmatmul.mubr.f32.gmra.mxu0 %v283
        %v769 = vpop.f32.mrf.mxu0
        %v770 = vadd.f32 %v383, %v769
        %v771 = vpop.f32.mrf.mxu0
        %v772 = vadd.f32 %v387, %v771
        %773 = vmatprep.mubr.f32.mxu0 0.0
        %774 = vmatmul.mubr.f32.gmra.mxu0 %v284
        %v775 = vpop.f32.mrf.mxu0
        %v776 = vadd.f32 %v383, %v775
        %v777 = vpop.f32.mrf.mxu0
        %v778 = vadd.f32 %v387, %v777
        %779 = vmatprep.mubr.f32.mxu0 0.0
        %780 = vmatmul.mubr.f32.gmra.mxu0 %v285
        %v781 = vpop.f32.mrf.mxu0
        %v782 = vadd.f32 %v383, %v781
        %v783 = vpop.f32.mrf.mxu0
        %v784 = vadd.f32 %v387, %v783
        %785 = vmatprep.mubr.f32.mxu0 0.0
        %786 = vmatmul.mubr.f32.gmra.mxu0 %v286
        %v787 = vpop.f32.mrf.mxu0
        %v788 = vadd.f32 %v383, %v787
        %v789 = vpop.f32.mrf.mxu0
        %v790 = vadd.f32 %v387, %v789
        %791 = vmatprep.mubr.f32.mxu0 0.0
        %792 = vmatmul.mubr.f32.gmra.mxu0 %v287
        %v793 = vpop.f32.mrf.mxu0
        %v794 = vadd.f32 %v383, %v793
        %v795 = vpop.f32.mrf.mxu0
        %v796 = vadd.f32 %v387, %v795
        %797 = vmatprep.mubr.f32.mxu0 0.0
        %798 = vmatmul.mubr.f32.gmra.mxu0 %v288
        %v799 = vpop.f32.mrf.mxu0
        %v800 = vadd.f32 %v383, %v799
        %v801 = vpop.f32.mrf.mxu0
        %v802 = vadd.f32 %v387, %v801
        %803 = vmatprep.mubr.f32.mxu0 0.0
        %804 = vmatmul.mubr.f32.gmra.mxu0 %v289
        %v805 = vpop.f32.mrf.mxu0
        %v806 = vadd.f32 %v383, %v805
        %v807 = vpop.f32.mrf.mxu0
        %v808 = vadd.f32 %v387, %v807
        %809 = vmatprep.mubr.f32.mxu0 0.0
        %810 = vmatmul.mubr.f32.gmra.mxu0 %v290
        %v811 = vpop.f32.mrf.mxu0
        %v812 = vadd.f32 %v383, %v811
        %v813 = vpop.f32.mrf.mxu0
        %v814 = vadd.f32 %v387, %v813
        %815 = vmatprep.mubr.f32.mxu0 0.0
        %816 = vmatmul.mubr.f32.gmra.mxu0 %v291
        %v817 = vpop.f32.mrf.mxu0
        %v818 = vadd.f32 %v383, %v817
        %v819 = vpop.f32.mrf.mxu0
        %v820 = vadd.f32 %v387, %v819
        %821 = vmatprep.mubr.f32.mxu0 0.0
        %822 = vmatmul.mubr.f32.gmra.mxu0 %v292
        %v823 = vpop.f32.mrf.mxu0
        %v824 = vadd.f32 %v383, %v823
        %v825 = vpop.f32.mrf.mxu0
        %v826 = vadd.f32 %v387, %v825
        %827 = vmatprep.mubr.f32.mxu0 0.0
        %828 = vmatmul.mubr.f32.gmra.mxu0 %v293
        %v829 = vpop.f32.mrf.mxu0
        %v830 = vadd.f32 %v383, %v829
        %v831 = vpop.f32.mrf.mxu0
        %v832 = vadd.f32 %v387, %v831
        %833 = vmatprep.mubr.f32.mxu0 0.0
        %834 = vmatmul.mubr.f32.gmra.mxu0 %v294
        %v835 = vpop.f32.mrf.mxu0
        %v836 = vadd.f32 %v383, %v835
        %v837 = vpop.f32.mrf.mxu0
        %v838 = vadd.f32 %v387, %v837
        %839 = vmatprep.mubr.f32.mxu0 0.0
        %840 = vmatmul.mubr.f32.gmra.mxu0 %v295
        %v841 = vpop.f32.mrf.mxu0
        %v842 = vadd.f32 %v383, %v841
        %v843 = vpop.f32.mrf.mxu0
        %v844 = vadd.f32 %v387, %v843
        %845 = vmatprep.mubr.f32.mxu0 0.0
        %846 = vmatmul.mubr.f32.gmra.mxu0 %v296
        %v847 = vpop.f32.mrf.mxu0
        %v848 = vadd.f32 %v383, %v847
        %v849 = vpop.f32.mrf.mxu0
        %v850 = vadd.f32 %v387, %v849
        %851 = vmatprep.mubr.f32.mxu0 0.0
        %852 = vmatmul.mubr.f32.gmra.mxu0 %v297
        %v853 = vpop.f32.mrf.mxu0
        %v854 = vadd.f32 %v383, %v853
        %v855 = vpop.f32.mrf.mxu0
        %v856 = vadd.f32 %v387, %v855
        %857 = vmatprep.mubr.f32.mxu0 0.0
        %858 = vmatmul.mubr.f32.gmra.mxu0 %v298
        %v859 = vpop.f32.mrf.mxu0
        %v860 = vadd.f32 %v383, %v859
        %v861 = vpop.f32.mrf.mxu0
        %v862 = vadd.f32 %v387, %v861
        %863 = vmatprep.mubr.f32.mxu0 0.0
        %864 = vmatmul.mubr.f32.gmra.mxu0 %v299
        %v865 = vpop.f32.mrf.mxu0
        %v866 = vadd.f32 %v383, %v865
        %v867 = vpop.f32.mrf.mxu0
        %v868 = vadd.f32 %v387, %v867
        %869 = vmatprep.mubr.f32.mxu0 0.0
        %870 = vmatmul.mubr.f32.gmra.mxu0 %v300
        %v871 = vpop.f32.mrf.mxu0
        %v872 = vadd.f32 %v383, %v871
        %v873 = vpop.f32.mrf.mxu0
        %v874 = vadd.f32 %v387, %v873
        %875 = vmatprep.mubr.f32.mxu0 0.0
        %876 = vmatmul.mubr.f32.gmra.mxu0 %v301
        %v877 = vpop.f32.mrf.mxu0
        %v878 = vadd.f32 %v383, %v877
        %v879 = vpop.f32.mrf.mxu0
        %v880 = vadd.f32 %v387, %v879
        %881 = vmatprep.mubr.f32.mxu0 0.0
        %882 = vmatmul.mubr.f32.gmra.mxu0 %v302
        %v883 = vpop.f32.mrf.mxu0
        %v884 = vadd.f32 %v383, %v883
        %v885 = vpop.f32.mrf.mxu0
        %v886 = vadd.f32 %v387, %v885
        %887 = vmatprep.mubr.f32.mxu0 0.0
        %888 = vmatmul.mubr.f32.gmra.mxu0 %v303
        %v889 = vpop.f32.mrf.mxu0
        %v890 = vadd.f32 %v383, %v889
        %v891 = vpop.f32.mrf.mxu0
        %v892 = vadd.f32 %v387, %v891
        %893 = vmatprep.mubr.f32.mxu0 0.0
        %894 = vmatmul.mubr.f32.gmra.mxu0 %v304
        %v895 = vpop.f32.mrf.mxu0
        %v896 = vadd.f32 %v383, %v895
        %v897 = vpop.f32.mrf.mxu0
        %v898 = vadd.f32 %v387, %v897
        %899 = vmatprep.mubr.f32.mxu0 0.0
        %900 = vmatmul.mubr.f32.gmra.mxu0 %v305
        %v901 = vpop.f32.mrf.mxu0
        %v902 = vadd.f32 %v383, %v901
        %v903 = vpop.f32.mrf.mxu0
        %v904 = vadd.f32 %v387, %v903
        %905 = vdwg.mxu0
        %v906 = vmax.f32 %v459, 0.0
        %v907 = vmax.f32 %v461, 0.0
        %v908 = vmax.f32 %v716, 0.0
        %v909 = vmax.f32 %v718, 0.0
        %v910 = vmax.f32 %v465, 0.0
        %v911 = vmax.f32 %v467, 0.0
        %v912 = vmax.f32 %v722, 0.0
        %v913 = vmax.f32 %v724, 0.0
        %v914 = vmax.f32 %v471, 0.0
        %v915 = vmax.f32 %v473, 0.0
        %v916 = vmax.f32 %v728, 0.0
        %v917 = vmax.f32 %v730, 0.0
        %v918 = vmax.f32 %v477, 0.0
        %v919 = vmax.f32 %v479, 0.0
        %v920 = vmax.f32 %v734, 0.0
        %v921 = vmax.f32 %v736, 0.0
        %v922 = vmax.f32 %v483, 0.0
        %v923 = vmax.f32 %v485, 0.0
        %v924 = vmax.f32 %v740, 0.0
        %v925 = vmax.f32 %v742, 0.0
        %v926 = vmax.f32 %v489, 0.0
        %v927 = vmax.f32 %v491, 0.0
        %v928 = vmax.f32 %v746, 0.0
        %v929 = vmax.f32 %v748, 0.0
        %v930 = vmax.f32 %v495, 0.0
        %v931 = vmax.f32 %v497, 0.0
        %v932 = vmax.f32 %v752, 0.0
        %v933 = vmax.f32 %v754, 0.0
        %v934 = vmax.f32 %v501, 0.0
        %v935 = vmax.f32 %v503, 0.0
        %v936 = vmax.f32 %v758, 0.0
        %v937 = vmax.f32 %v760, 0.0
        %v938 = vmax.f32 %v507, 0.0
        %v939 = vmax.f32 %v509, 0.0
        %v940 = vmax.f32 %v764, 0.0
        %v941 = vmax.f32 %v766, 0.0
        %v942 = vmax.f32 %v513, 0.0
        %v943 = vmax.f32 %v515, 0.0
        %v944 = vmax.f32 %v770, 0.0
        %v945 = vmax.f32 %v772, 0.0
        %v946 = vmax.f32 %v519, 0.0
        %v947 = vmax.f32 %v521, 0.0
        %v948 = vmax.f32 %v776, 0.0
        %v949 = vmax.f32 %v778, 0.0
        %v950 = vmax.f32 %v525, 0.0
        %v951 = vmax.f32 %v527, 0.0
        %v952 = vmax.f32 %v782, 0.0
        %v953 = vmax.f32 %v784, 0.0
        %v954 = vmax.f32 %v531, 0.0
        %v955 = vmax.f32 %v533, 0.0
        %v956 = vmax.f32 %v788, 0.0
        %v957 = vmax.f32 %v790, 0.0
        %v958 = vmax.f32 %v537, 0.0
        %v959 = vmax.f32 %v539, 0.0
        %v960 = vmax.f32 %v794, 0.0
        %v961 = vmax.f32 %v796, 0.0
        %v962 = vmax.f32 %v543, 0.0
        %v963 = vmax.f32 %v545, 0.0
        %v964 = vmax.f32 %v800, 0.0
        %v965 = vmax.f32 %v802, 0.0
        %v966 = vmax.f32 %v549, 0.0
        %v967 = vmax.f32 %v551, 0.0
        %v968 = vmax.f32 %v806, 0.0
        %v969 = vmax.f32 %v808, 0.0
        %v970 = vmax.f32 %v555, 0.0
        %v971 = vmax.f32 %v557, 0.0
        %v972 = vmax.f32 %v812, 0.0
        %v973 = vmax.f32 %v814, 0.0
        %v974 = vmax.f32 %v561, 0.0
        %v975 = vmax.f32 %v563, 0.0
        %v976 = vmax.f32 %v818, 0.0
        %v977 = vmax.f32 %v820, 0.0
        %v978 = vmax.f32 %v567, 0.0
        %v979 = vmax.f32 %v569, 0.0
        %v980 = vmax.f32 %v824, 0.0
        %v981 = vmax.f32 %v826, 0.0
        %v982 = vmax.f32 %v573, 0.0
        %v983 = vmax.f32 %v575, 0.0
        %v984 = vmax.f32 %v830, 0.0
        %v985 = vmax.f32 %v832, 0.0
        %v986 = vmax.f32 %v579, 0.0
        %v987 = vmax.f32 %v581, 0.0
        %v988 = vmax.f32 %v836, 0.0
        %v989 = vmax.f32 %v838, 0.0
        %v990 = vmax.f32 %v585, 0.0
        %v991 = vmax.f32 %v587, 0.0
        %v992 = vmax.f32 %v842, 0.0
        %v993 = vmax.f32 %v844, 0.0
        %v994 = vmax.f32 %v591, 0.0
        %v995 = vmax.f32 %v593, 0.0
        %v996 = vmax.f32 %v848, 0.0
        %v997 = vmax.f32 %v850, 0.0
        %v998 = vmax.f32 %v597, 0.0
        %v999 = vmax.f32 %v599, 0.0
        %v1000 = vmax.f32 %v854, 0.0
        %v1001 = vmax.f32 %v856, 0.0
        %v1002 = vmax.f32 %v603, 0.0
        %v1003 = vmax.f32 %v605, 0.0
        %v1004 = vmax.f32 %v860, 0.0
        %v1005 = vmax.f32 %v862, 0.0
        %v1006 = vmax.f32 %v609, 0.0
        %v1007 = vmax.f32 %v611, 0.0
        %v1008 = vmax.f32 %v866, 0.0
        %v1009 = vmax.f32 %v868, 0.0
        %v1010 = vmax.f32 %v615, 0.0
        %v1011 = vmax.f32 %v617, 0.0
        %v1012 = vmax.f32 %v872, 0.0
        %v1013 = vmax.f32 %v874, 0.0
        %v1014 = vmax.f32 %v621, 0.0
        %v1015 = vmax.f32 %v623, 0.0
        %v1016 = vmax.f32 %v878, 0.0
        %v1017 = vmax.f32 %v880, 0.0
        %v1018 = vmax.f32 %v627, 0.0
        %v1019 = vmax.f32 %v629, 0.0
        %v1020 = vmax.f32 %v884, 0.0
        %v1021 = vmax.f32 %v886, 0.0
        %v1022 = vmax.f32 %v633, 0.0
        %v1023 = vmax.f32 %v635, 0.0
        %v1024 = vmax.f32 %v890, 0.0
        %v1025 = vmax.f32 %v892, 0.0
        %v1026 = vmax.f32 %v639, 0.0
        %v1027 = vmax.f32 %v641, 0.0
        %v1028 = vmax.f32 %v896, 0.0
        %v1029 = vmax.f32 %v898, 0.0
        %v1030 = vmax.f32 %v645, 0.0
        %v1031 = vmax.f32 %v647, 0.0
        %v1032 = vmax.f32 %v902, 0.0
        %v1033 = vmax.f32 %v904, 0.0
        %v1034 = vld [vmem:[#allocation7] sm:$0xff]
        %v1035 = vld [vmem:[#allocation7 + $0x8] sm:$0xff]
        %v1036 = vld [vmem:[#allocation7 + $0x10] sm:$0xff]
        %v1037 = vld [vmem:[#allocation7 + $0x18] sm:$0xff]
        %v1038 = vld [vmem:[#allocation7 + $0x20] sm:$0xff]
        %v1039 = vld [vmem:[#allocation7 + $0x28] sm:$0xff]
        %v1040 = vld [vmem:[#allocation7 + $0x30] sm:$0xff]
        %v1041 = vld [vmem:[#allocation7 + $0x38] sm:$0xff]
        %v1042 = vld [vmem:[#allocation7 + $0x40] sm:$0xff]
        %v1043 = vld [vmem:[#allocation7 + $0x48] sm:$0xff]
        %v1044 = vld [vmem:[#allocation7 + $0x50] sm:$0xff]
        %v1045 = vld [vmem:[#allocation7 + $0x58] sm:$0xff]
        %v1046 = vld [vmem:[#allocation7 + $0x60] sm:$0xff]
        %v1047 = vld [vmem:[#allocation7 + $0x68] sm:$0xff]
        %v1048 = vld [vmem:[#allocation7 + $0x70] sm:$0xff]
        %v1049 = vld [vmem:[#allocation7 + $0x78] sm:$0xff]
        %v1050 = vld [vmem:[#allocation7 + $0x80] sm:$0xff]
        %v1051 = vld [vmem:[#allocation7 + $0x88] sm:$0xff]
        %v1052 = vld [vmem:[#allocation7 + $0x90] sm:$0xff]
        %v1053 = vld [vmem:[#allocation7 + $0x98] sm:$0xff]
        %v1054 = vld [vmem:[#allocation7 + $0xa0] sm:$0xff]
        %v1055 = vld [vmem:[#allocation7 + $0xa8] sm:$0xff]
        %v1056 = vld [vmem:[#allocation7 + $0xb0] sm:$0xff]
        %v1057 = vld [vmem:[#allocation7 + $0xb8] sm:$0xff]
        %v1058 = vld [vmem:[#allocation7 + $0xc0] sm:$0xff]
        %v1059 = vld [vmem:[#allocation7 + $0xc8] sm:$0xff]
        %v1060 = vld [vmem:[#allocation7 + $0xd0] sm:$0xff]
        %v1061 = vld [vmem:[#allocation7 + $0xd8] sm:$0xff]
        %v1062 = vld [vmem:[#allocation7 + $0xe0] sm:$0xff]
        %v1063 = vld [vmem:[#allocation7 + $0xe8] sm:$0xff]
        %v1064 = vld [vmem:[#allocation7 + $0xf0] sm:$0xff]
        %v1065 = vld [vmem:[#allocation7 + $0xf8] sm:$0xff]
        %v1066 = vld [vmem:[#allocation7 + $0x100] sm:$0xff]
        %v1067 = vld [vmem:[#allocation7 + $0x108] sm:$0xff]
        %v1068 = vld [vmem:[#allocation7 + $0x110] sm:$0xff]
        %v1069 = vld [vmem:[#allocation7 + $0x118] sm:$0xff]
        %v1070 = vld [vmem:[#allocation7 + $0x120] sm:$0xff]
        %v1071 = vld [vmem:[#allocation7 + $0x128] sm:$0xff]
        %v1072 = vld [vmem:[#allocation7 + $0x130] sm:$0xff]
        %v1073 = vld [vmem:[#allocation7 + $0x138] sm:$0xff]
        %v1074 = vld [vmem:[#allocation7 + $0x140] sm:$0xff]
        %v1075 = vld [vmem:[#allocation7 + $0x148] sm:$0xff]
        %v1076 = vld [vmem:[#allocation7 + $0x150] sm:$0xff]
        %v1077 = vld [vmem:[#allocation7 + $0x158] sm:$0xff]
        %v1078 = vld [vmem:[#allocation7 + $0x160] sm:$0xff]
        %v1079 = vld [vmem:[#allocation7 + $0x168] sm:$0xff]
        %v1080 = vld [vmem:[#allocation7 + $0x170] sm:$0xff]
        %v1081 = vld [vmem:[#allocation7 + $0x178] sm:$0xff]
        %v1082 = vld [vmem:[#allocation7 + $0x180] sm:$0xff]
        %v1083 = vld [vmem:[#allocation7 + $0x188] sm:$0xff]
        %v1084 = vld [vmem:[#allocation7 + $0x190] sm:$0xff]
        %v1085 = vld [vmem:[#allocation7 + $0x198] sm:$0xff]
        %v1086 = vld [vmem:[#allocation7 + $0x1a0] sm:$0xff]
        %v1087 = vld [vmem:[#allocation7 + $0x1a8] sm:$0xff]
        %v1088 = vld [vmem:[#allocation7 + $0x1b0] sm:$0xff]
        %v1089 = vld [vmem:[#allocation7 + $0x1b8] sm:$0xff]
        %v1090 = vld [vmem:[#allocation7 + $0x1c0] sm:$0xff]
        %v1091 = vld [vmem:[#allocation7 + $0x1c8] sm:$0xff]
        %v1092 = vld [vmem:[#allocation7 + $0x1d0] sm:$0xff]
        %v1093 = vld [vmem:[#allocation7 + $0x1d8] sm:$0xff]
        %v1094 = vld [vmem:[#allocation7 + $0x1e0] sm:$0xff]
        %v1095 = vld [vmem:[#allocation7 + $0x1e8] sm:$0xff]
        %v1096 = vld [vmem:[#allocation7 + $0x1f0] sm:$0xff]
        %v1097 = vld [vmem:[#allocation7 + $0x1f8] sm:$0xff]
        %v1098 = vld [vmem:[%s4] sm:$0x1]
        %v1100 = vlaneseq
        %v1101 = vshrl.u32 %v1100, 7
        %v1102 = vsub.s32 0, %v1101
        %v1103 = vrot.slane %v1098, %v1102
        %1105 = vmatprep.subr.mxu0 0.0
        %1106 = vmatpush1.msra.mxu0 %v1049
        %1107 = vmatprep.subr.mxu0 0.0
        %1108 = vmatpush1.msra.mxu0 %v1048
        %1109 = vmatprep.subr.mxu0 0.0
        %1110 = vmatpush1.msra.mxu0 %v1047
        %1111 = vmatprep.subr.mxu0 0.0
        %1112 = vmatpush1.msra.mxu0 %v1046
        %1113 = vmatprep.subr.mxu0 0.0
        %1114 = vmatpush1.msra.mxu0 %v1045
        %1115 = vmatprep.subr.mxu0 0.0
        %1116 = vmatpush1.msra.mxu0 %v1044
        %1117 = vmatprep.subr.mxu0 0.0
        %1118 = vmatpush1.msra.mxu0 %v1043
        %1119 = vmatprep.subr.mxu0 0.0
        %1120 = vmatpush1.msra.mxu0 %v1042
        %1121 = vmatprep.subr.mxu0 0.0
        %1122 = vmatpush1.msra.mxu0 %v1041
        %1123 = vmatprep.subr.mxu0 0.0
        %1124 = vmatpush1.msra.mxu0 %v1040
        %1125 = vmatprep.subr.mxu0 0.0
        %1126 = vmatpush1.msra.mxu0 %v1039
        %1127 = vmatprep.subr.mxu0 0.0
        %1128 = vmatpush1.msra.mxu0 %v1038
        %1129 = vmatprep.subr.mxu0 0.0
        %1130 = vmatpush1.msra.mxu0 %v1037
        %1131 = vmatprep.subr.mxu0 0.0
        %1132 = vmatpush1.msra.mxu0 %v1036
        %1133 = vmatprep.subr.mxu0 0.0
        %1134 = vmatpush1.msra.mxu0 %v1035
        %1135 = vmatprep.subr.mxu0 0.0
        %1136 = vmatpush1.msra.mxu0 %v1034
        %1137 = vmatprep.subr.mxu0 0.0
        %1138 = vmatpush2.msra.mxu0 %v1065
        %1139 = vmatprep.subr.mxu0 0.0
        %1140 = vmatpush2.msra.mxu0 %v1064
        %1141 = vmatprep.subr.mxu0 0.0
        %1142 = vmatpush2.msra.mxu0 %v1063
        %1143 = vmatprep.subr.mxu0 0.0
        %1144 = vmatpush2.msra.mxu0 %v1062
        %1145 = vmatprep.subr.mxu0 0.0
        %1146 = vmatpush2.msra.mxu0 %v1061
        %1147 = vmatprep.subr.mxu0 0.0
        %1148 = vmatpush2.msra.mxu0 %v1060
        %1149 = vmatprep.subr.mxu0 0.0
        %1150 = vmatpush2.msra.mxu0 %v1059
        %1151 = vmatprep.subr.mxu0 0.0
        %1152 = vmatpush2.msra.mxu0 %v1058
        %1153 = vmatprep.subr.mxu0 0.0
        %1154 = vmatpush2.msra.mxu0 %v1057
        %1155 = vmatprep.subr.mxu0 0.0
        %1156 = vmatpush2.msra.mxu0 %v1056
        %1157 = vmatprep.subr.mxu0 0.0
        %1158 = vmatpush2.msra.mxu0 %v1055
        %1159 = vmatprep.subr.mxu0 0.0
        %1160 = vmatpush2.msra.mxu0 %v1054
        %1161 = vmatprep.subr.mxu0 0.0
        %1162 = vmatpush2.msra.mxu0 %v1053
        %1163 = vmatprep.subr.mxu0 0.0
        %1164 = vmatpush2.msra.mxu0 %v1052
        %1165 = vmatprep.subr.mxu0 0.0
        %1166 = vmatpush2.msra.mxu0 %v1051
        %1167 = vmatprep.subr.mxu0 0.0
        %1168 = vmatpush2.msra.mxu0 %v1050
        %1169 = vmatprep.mubr.f32.mxu0 %v907
        %1170 = vmatmul.mubr.f32.gmra.mxu0 %v906
        %v1171 = vpop.f32.mrf.mxu0
        %v1172 = vadd.f32 %v1103, %v1171
        %v1173 = vpop.f32.mrf.mxu0
        %1174 = vmatprep.mubr.f32.mxu0 %v911
        %1175 = vmatmul.mubr.f32.gmra.mxu0 %v910
        %v1176 = vpop.f32.mrf.mxu0
        %v1177 = vadd.f32 %v1103, %v1176
        %v1178 = vpop.f32.mrf.mxu0
        %1179 = vmatprep.mubr.f32.mxu0 %v915
        %1180 = vmatmul.mubr.f32.gmra.mxu0 %v914
        %v1181 = vpop.f32.mrf.mxu0
        %v1182 = vadd.f32 %v1103, %v1181
        %v1183 = vpop.f32.mrf.mxu0
        %1184 = vmatprep.mubr.f32.mxu0 %v919
        %1185 = vmatmul.mubr.f32.gmra.mxu0 %v918
        %v1186 = vpop.f32.mrf.mxu0
        %v1187 = vadd.f32 %v1103, %v1186
        %v1188 = vpop.f32.mrf.mxu0
        %1189 = vmatprep.mubr.f32.mxu0 %v923
        %1190 = vmatmul.mubr.f32.gmra.mxu0 %v922
        %v1191 = vpop.f32.mrf.mxu0
        %v1192 = vadd.f32 %v1103, %v1191
        %v1193 = vpop.f32.mrf.mxu0
        %1194 = vmatprep.mubr.f32.mxu0 %v927
        %1195 = vmatmul.mubr.f32.gmra.mxu0 %v926
        %v1196 = vpop.f32.mrf.mxu0
        %v1197 = vadd.f32 %v1103, %v1196
        %v1198 = vpop.f32.mrf.mxu0
        %1199 = vmatprep.mubr.f32.mxu0 %v931
        %1200 = vmatmul.mubr.f32.gmra.mxu0 %v930
        %v1201 = vpop.f32.mrf.mxu0
        %v1202 = vadd.f32 %v1103, %v1201
        %v1203 = vpop.f32.mrf.mxu0
        %1204 = vmatprep.mubr.f32.mxu0 %v935
        %1205 = vmatmul.mubr.f32.gmra.mxu0 %v934
        %v1206 = vpop.f32.mrf.mxu0
        %v1207 = vadd.f32 %v1103, %v1206
        %v1208 = vpop.f32.mrf.mxu0
        %1209 = vmatprep.mubr.f32.mxu0 %v939
        %1210 = vmatmul.mubr.f32.gmra.mxu0 %v938
        %v1211 = vpop.f32.mrf.mxu0
        %v1212 = vadd.f32 %v1103, %v1211
        %v1213 = vpop.f32.mrf.mxu0
        %1214 = vmatprep.mubr.f32.mxu0 %v943
        %1215 = vmatmul.mubr.f32.gmra.mxu0 %v942
        %v1216 = vpop.f32.mrf.mxu0
        %v1217 = vadd.f32 %v1103, %v1216
        %v1218 = vpop.f32.mrf.mxu0
        %1219 = vmatprep.mubr.f32.mxu0 %v947
        %1220 = vmatmul.mubr.f32.gmra.mxu0 %v946
        %v1221 = vpop.f32.mrf.mxu0
        %v1222 = vadd.f32 %v1103, %v1221
        %v1223 = vpop.f32.mrf.mxu0
        %1224 = vmatprep.mubr.f32.mxu0 %v951
        %1225 = vmatmul.mubr.f32.gmra.mxu0 %v950
        %v1226 = vpop.f32.mrf.mxu0
        %v1227 = vadd.f32 %v1103, %v1226
        %v1228 = vpop.f32.mrf.mxu0
        %1229 = vmatprep.mubr.f32.mxu0 %v955
        %1230 = vmatmul.mubr.f32.gmra.mxu0 %v954
        %v1231 = vpop.f32.mrf.mxu0
        %v1232 = vadd.f32 %v1103, %v1231
        %v1233 = vpop.f32.mrf.mxu0
        %1234 = vmatprep.mubr.f32.mxu0 %v959
        %1235 = vmatmul.mubr.f32.gmra.mxu0 %v958
        %v1236 = vpop.f32.mrf.mxu0
        %v1237 = vadd.f32 %v1103, %v1236
        %v1238 = vpop.f32.mrf.mxu0
        %1239 = vmatprep.mubr.f32.mxu0 %v963
        %1240 = vmatmul.mubr.f32.gmra.mxu0 %v962
        %v1241 = vpop.f32.mrf.mxu0
        %v1242 = vadd.f32 %v1103, %v1241
        %v1243 = vpop.f32.mrf.mxu0
        %1244 = vmatprep.mubr.f32.mxu0 %v967
        %1245 = vmatmul.mubr.f32.gmra.mxu0 %v966
        %v1246 = vpop.f32.mrf.mxu0
        %v1247 = vadd.f32 %v1103, %v1246
        %v1248 = vpop.f32.mrf.mxu0
        %1249 = vmatprep.mubr.f32.mxu0 %v971
        %1250 = vmatmul.mubr.f32.gmra.mxu0 %v970
        %v1251 = vpop.f32.mrf.mxu0
        %v1252 = vadd.f32 %v1103, %v1251
        %v1253 = vpop.f32.mrf.mxu0
        %1254 = vmatprep.mubr.f32.mxu0 %v975
        %1255 = vmatmul.mubr.f32.gmra.mxu0 %v974
        %v1256 = vpop.f32.mrf.mxu0
        %v1257 = vadd.f32 %v1103, %v1256
        %v1258 = vpop.f32.mrf.mxu0
        %1259 = vmatprep.mubr.f32.mxu0 %v979
        %1260 = vmatmul.mubr.f32.gmra.mxu0 %v978
        %v1261 = vpop.f32.mrf.mxu0
        %v1262 = vadd.f32 %v1103, %v1261
        %v1263 = vpop.f32.mrf.mxu0
        %1264 = vmatprep.mubr.f32.mxu0 %v983
        %1265 = vmatmul.mubr.f32.gmra.mxu0 %v982
        %v1266 = vpop.f32.mrf.mxu0
        %v1267 = vadd.f32 %v1103, %v1266
        %v1268 = vpop.f32.mrf.mxu0
        %1269 = vmatprep.mubr.f32.mxu0 %v987
        %1270 = vmatmul.mubr.f32.gmra.mxu0 %v986
        %v1271 = vpop.f32.mrf.mxu0
        %v1272 = vadd.f32 %v1103, %v1271
        %v1273 = vpop.f32.mrf.mxu0
        %1274 = vmatprep.mubr.f32.mxu0 %v991
        %1275 = vmatmul.mubr.f32.gmra.mxu0 %v990
        %v1276 = vpop.f32.mrf.mxu0
        %v1277 = vadd.f32 %v1103, %v1276
        %v1278 = vpop.f32.mrf.mxu0
        %1279 = vmatprep.mubr.f32.mxu0 %v995
        %1280 = vmatmul.mubr.f32.gmra.mxu0 %v994
        %v1281 = vpop.f32.mrf.mxu0
        %v1282 = vadd.f32 %v1103, %v1281
        %v1283 = vpop.f32.mrf.mxu0
        %1284 = vmatprep.mubr.f32.mxu0 %v999
        %1285 = vmatmul.mubr.f32.gmra.mxu0 %v998
        %v1286 = vpop.f32.mrf.mxu0
        %v1287 = vadd.f32 %v1103, %v1286
        %v1288 = vpop.f32.mrf.mxu0
        %1289 = vmatprep.mubr.f32.mxu0 %v1003
        %1290 = vmatmul.mubr.f32.gmra.mxu0 %v1002
        %v1291 = vpop.f32.mrf.mxu0
        %v1292 = vadd.f32 %v1103, %v1291
        %v1293 = vpop.f32.mrf.mxu0
        %1294 = vmatprep.mubr.f32.mxu0 %v1007
        %1295 = vmatmul.mubr.f32.gmra.mxu0 %v1006
        %v1296 = vpop.f32.mrf.mxu0
        %v1297 = vadd.f32 %v1103, %v1296
        %v1298 = vpop.f32.mrf.mxu0
        %1299 = vmatprep.mubr.f32.mxu0 %v1011
        %1300 = vmatmul.mubr.f32.gmra.mxu0 %v1010
        %v1301 = vpop.f32.mrf.mxu0
        %v1302 = vadd.f32 %v1103, %v1301
        %v1303 = vpop.f32.mrf.mxu0
        %1304 = vmatprep.mubr.f32.mxu0 %v1015
        %1305 = vmatmul.mubr.f32.gmra.mxu0 %v1014
        %v1306 = vpop.f32.mrf.mxu0
        %v1307 = vadd.f32 %v1103, %v1306
        %v1308 = vpop.f32.mrf.mxu0
        %1309 = vmatprep.mubr.f32.mxu0 %v1019
        %1310 = vmatmul.mubr.f32.gmra.mxu0 %v1018
        %v1311 = vpop.f32.mrf.mxu0
        %v1312 = vadd.f32 %v1103, %v1311
        %v1313 = vpop.f32.mrf.mxu0
        %1314 = vmatprep.mubr.f32.mxu0 %v1023
        %1315 = vmatmul.mubr.f32.gmra.mxu0 %v1022
        %v1316 = vpop.f32.mrf.mxu0
        %v1317 = vadd.f32 %v1103, %v1316
        %v1318 = vpop.f32.mrf.mxu0
        %1319 = vmatprep.mubr.f32.mxu0 %v1027
        %1320 = vmatmul.mubr.f32.gmra.mxu0 %v1026
        %v1321 = vpop.f32.mrf.mxu0
        %v1322 = vadd.f32 %v1103, %v1321
        %v1323 = vpop.f32.mrf.mxu0
        %1324 = vmatprep.mubr.f32.mxu0 %v1031
        %1325 = vmatmul.mubr.f32.gmra.mxu0 %v1030
        %v1326 = vpop.f32.mrf.mxu0
        %v1327 = vadd.f32 %v1103, %v1326
        %v1328 = vpop.f32.mrf.mxu0
        %1329 = vdwg.mxu0
        %1330 = vmatprep.subr.mxu0 0.0
        %1331 = vmatpush1.msra.mxu0 %v1081
        %1332 = vmatprep.subr.mxu0 0.0
        %1333 = vmatpush1.msra.mxu0 %v1080
        %1334 = vmatprep.subr.mxu0 0.0
        %1335 = vmatpush1.msra.mxu0 %v1079
        %1336 = vmatprep.subr.mxu0 0.0
        %1337 = vmatpush1.msra.mxu0 %v1078
        %1338 = vmatprep.subr.mxu0 0.0
        %1339 = vmatpush1.msra.mxu0 %v1077
        %1340 = vmatprep.subr.mxu0 0.0
        %1341 = vmatpush1.msra.mxu0 %v1076
        %1342 = vmatprep.subr.mxu0 0.0
        %1343 = vmatpush1.msra.mxu0 %v1075
        %1344 = vmatprep.subr.mxu0 0.0
        %1345 = vmatpush1.msra.mxu0 %v1074
        %1346 = vmatprep.subr.mxu0 0.0
        %1347 = vmatpush1.msra.mxu0 %v1073
        %1348 = vmatprep.subr.mxu0 0.0
        %1349 = vmatpush1.msra.mxu0 %v1072
        %1350 = vmatprep.subr.mxu0 0.0
        %1351 = vmatpush1.msra.mxu0 %v1071
        %1352 = vmatprep.subr.mxu0 0.0
        %1353 = vmatpush1.msra.mxu0 %v1070
        %1354 = vmatprep.subr.mxu0 0.0
        %1355 = vmatpush1.msra.mxu0 %v1069
        %1356 = vmatprep.subr.mxu0 0.0
        %1357 = vmatpush1.msra.mxu0 %v1068
        %1358 = vmatprep.subr.mxu0 0.0
        %1359 = vmatpush1.msra.mxu0 %v1067
        %1360 = vmatprep.subr.mxu0 0.0
        %1361 = vmatpush1.msra.mxu0 %v1066
        %1362 = vmatprep.subr.mxu0 0.0
        %1363 = vmatpush2.msra.mxu0 %v1097
        %1364 = vmatprep.subr.mxu0 0.0
        %1365 = vmatpush2.msra.mxu0 %v1096
        %1366 = vmatprep.subr.mxu0 0.0
        %1367 = vmatpush2.msra.mxu0 %v1095
        %1368 = vmatprep.subr.mxu0 0.0
        %1369 = vmatpush2.msra.mxu0 %v1094
        %1370 = vmatprep.subr.mxu0 0.0
        %1371 = vmatpush2.msra.mxu0 %v1093
        %1372 = vmatprep.subr.mxu0 0.0
        %1373 = vmatpush2.msra.mxu0 %v1092
        %1374 = vmatprep.subr.mxu0 0.0
        %1375 = vmatpush2.msra.mxu0 %v1091
        %1376 = vmatprep.subr.mxu0 0.0
        %1377 = vmatpush2.msra.mxu0 %v1090
        %1378 = vmatprep.subr.mxu0 0.0
        %1379 = vmatpush2.msra.mxu0 %v1089
        %1380 = vmatprep.subr.mxu0 0.0
        %1381 = vmatpush2.msra.mxu0 %v1088
        %1382 = vmatprep.subr.mxu0 0.0
        %1383 = vmatpush2.msra.mxu0 %v1087
        %1384 = vmatprep.subr.mxu0 0.0
        %1385 = vmatpush2.msra.mxu0 %v1086
        %1386 = vmatprep.subr.mxu0 0.0
        %1387 = vmatpush2.msra.mxu0 %v1085
        %1388 = vmatprep.subr.mxu0 0.0
        %1389 = vmatpush2.msra.mxu0 %v1084
        %1390 = vmatprep.subr.mxu0 0.0
        %1391 = vmatpush2.msra.mxu0 %v1083
        %1392 = vmatprep.subr.mxu0 0.0
        %1393 = vmatpush2.msra.mxu0 %v1082
        %1394 = vmatprep.mubr.f32.mxu0 %v909
        %1395 = vmatmul.mubr.f32.gmra.mxu0 %v908
        %v1396 = vpop.f32.mrf.mxu0
        %v1397 = vadd.f32 %v1172, %v1396
        %v1398 = vpop.f32.mrf.mxu0
        %1399 = vmatprep.mubr.f32.mxu0 %v913
        %1400 = vmatmul.mubr.f32.gmra.mxu0 %v912
        %v1401 = vpop.f32.mrf.mxu0
        %v1402 = vadd.f32 %v1177, %v1401
        %v1403 = vpop.f32.mrf.mxu0
        %1404 = vmatprep.mubr.f32.mxu0 %v917
        %1405 = vmatmul.mubr.f32.gmra.mxu0 %v916
        %v1406 = vpop.f32.mrf.mxu0
        %v1407 = vadd.f32 %v1182, %v1406
        %v1408 = vpop.f32.mrf.mxu0
        %1409 = vmatprep.mubr.f32.mxu0 %v921
        %1410 = vmatmul.mubr.f32.gmra.mxu0 %v920
        %v1411 = vpop.f32.mrf.mxu0
        %v1412 = vadd.f32 %v1187, %v1411
        %v1413 = vpop.f32.mrf.mxu0
        %1414 = vmatprep.mubr.f32.mxu0 %v925
        %1415 = vmatmul.mubr.f32.gmra.mxu0 %v924
        %v1416 = vpop.f32.mrf.mxu0
        %v1417 = vadd.f32 %v1192, %v1416
        %v1418 = vpop.f32.mrf.mxu0
        %1419 = vmatprep.mubr.f32.mxu0 %v929
        %1420 = vmatmul.mubr.f32.gmra.mxu0 %v928
        %v1421 = vpop.f32.mrf.mxu0
        %v1422 = vadd.f32 %v1197, %v1421
        %v1423 = vpop.f32.mrf.mxu0
        %1424 = vmatprep.mubr.f32.mxu0 %v933
        %1425 = vmatmul.mubr.f32.gmra.mxu0 %v932
        %v1426 = vpop.f32.mrf.mxu0
        %v1427 = vadd.f32 %v1202, %v1426
        %v1428 = vpop.f32.mrf.mxu0
        %1429 = vmatprep.mubr.f32.mxu0 %v937
        %1430 = vmatmul.mubr.f32.gmra.mxu0 %v936
        %v1431 = vpop.f32.mrf.mxu0
        %v1432 = vadd.f32 %v1207, %v1431
        %v1433 = vpop.f32.mrf.mxu0
        %1434 = vmatprep.mubr.f32.mxu0 %v941
        %1435 = vmatmul.mubr.f32.gmra.mxu0 %v940
        %v1436 = vpop.f32.mrf.mxu0
        %v1437 = vadd.f32 %v1212, %v1436
        %v1438 = vpop.f32.mrf.mxu0
        %1439 = vmatprep.mubr.f32.mxu0 %v945
        %1440 = vmatmul.mubr.f32.gmra.mxu0 %v944
        %v1441 = vpop.f32.mrf.mxu0
        %v1442 = vadd.f32 %v1217, %v1441
        %v1443 = vpop.f32.mrf.mxu0
        %1444 = vmatprep.mubr.f32.mxu0 %v949
        %1445 = vmatmul.mubr.f32.gmra.mxu0 %v948
        %v1446 = vpop.f32.mrf.mxu0
        %v1447 = vadd.f32 %v1222, %v1446
        %v1448 = vpop.f32.mrf.mxu0
        %1449 = vmatprep.mubr.f32.mxu0 %v953
        %1450 = vmatmul.mubr.f32.gmra.mxu0 %v952
        %v1451 = vpop.f32.mrf.mxu0
        %v1452 = vadd.f32 %v1227, %v1451
        %v1453 = vpop.f32.mrf.mxu0
        %1454 = vmatprep.mubr.f32.mxu0 %v957
        %1455 = vmatmul.mubr.f32.gmra.mxu0 %v956
        %v1456 = vpop.f32.mrf.mxu0
        %v1457 = vadd.f32 %v1232, %v1456
        %v1458 = vpop.f32.mrf.mxu0
        %1459 = vmatprep.mubr.f32.mxu0 %v961
        %1460 = vmatmul.mubr.f32.gmra.mxu0 %v960
        %v1461 = vpop.f32.mrf.mxu0
        %v1462 = vadd.f32 %v1237, %v1461
        %v1463 = vpop.f32.mrf.mxu0
        %1464 = vmatprep.mubr.f32.mxu0 %v965
        %1465 = vmatmul.mubr.f32.gmra.mxu0 %v964
        %v1466 = vpop.f32.mrf.mxu0
        %v1467 = vadd.f32 %v1242, %v1466
        %v1468 = vpop.f32.mrf.mxu0
        %1469 = vmatprep.mubr.f32.mxu0 %v969
        %1470 = vmatmul.mubr.f32.gmra.mxu0 %v968
        %v1471 = vpop.f32.mrf.mxu0
        %v1472 = vadd.f32 %v1247, %v1471
        %v1473 = vpop.f32.mrf.mxu0
        %1474 = vmatprep.mubr.f32.mxu0 %v973
        %1475 = vmatmul.mubr.f32.gmra.mxu0 %v972
        %v1476 = vpop.f32.mrf.mxu0
        %v1477 = vadd.f32 %v1252, %v1476
        %v1478 = vpop.f32.mrf.mxu0
        %1479 = vmatprep.mubr.f32.mxu0 %v977
        %1480 = vmatmul.mubr.f32.gmra.mxu0 %v976
        %v1481 = vpop.f32.mrf.mxu0
        %v1482 = vadd.f32 %v1257, %v1481
        %v1483 = vpop.f32.mrf.mxu0
        %1484 = vmatprep.mubr.f32.mxu0 %v981
        %1485 = vmatmul.mubr.f32.gmra.mxu0 %v980
        %v1486 = vpop.f32.mrf.mxu0
        %v1487 = vadd.f32 %v1262, %v1486
        %v1488 = vpop.f32.mrf.mxu0
        %1489 = vmatprep.mubr.f32.mxu0 %v985
        %1490 = vmatmul.mubr.f32.gmra.mxu0 %v984
        %v1491 = vpop.f32.mrf.mxu0
        %v1492 = vadd.f32 %v1267, %v1491
        %v1493 = vpop.f32.mrf.mxu0
        %1494 = vmatprep.mubr.f32.mxu0 %v989
        %1495 = vmatmul.mubr.f32.gmra.mxu0 %v988
        %v1496 = vpop.f32.mrf.mxu0
        %v1497 = vadd.f32 %v1272, %v1496
        %v1498 = vpop.f32.mrf.mxu0
        %1499 = vmatprep.mubr.f32.mxu0 %v993
        %1500 = vmatmul.mubr.f32.gmra.mxu0 %v992
        %v1501 = vpop.f32.mrf.mxu0
        %v1502 = vadd.f32 %v1277, %v1501
        %v1503 = vpop.f32.mrf.mxu0
        %1504 = vmatprep.mubr.f32.mxu0 %v997
        %1505 = vmatmul.mubr.f32.gmra.mxu0 %v996
        %v1506 = vpop.f32.mrf.mxu0
        %v1507 = vadd.f32 %v1282, %v1506
        %v1508 = vpop.f32.mrf.mxu0
        %1509 = vmatprep.mubr.f32.mxu0 %v1001
        %1510 = vmatmul.mubr.f32.gmra.mxu0 %v1000
        %v1511 = vpop.f32.mrf.mxu0
        %v1512 = vadd.f32 %v1287, %v1511
        %v1513 = vpop.f32.mrf.mxu0
        %1514 = vmatprep.mubr.f32.mxu0 %v1005
        %1515 = vmatmul.mubr.f32.gmra.mxu0 %v1004
        %v1516 = vpop.f32.mrf.mxu0
        %v1517 = vadd.f32 %v1292, %v1516
        %v1518 = vpop.f32.mrf.mxu0
        %1519 = vmatprep.mubr.f32.mxu0 %v1009
        %1520 = vmatmul.mubr.f32.gmra.mxu0 %v1008
        %v1521 = vpop.f32.mrf.mxu0
        %v1522 = vadd.f32 %v1297, %v1521
        %v1523 = vpop.f32.mrf.mxu0
        %1524 = vmatprep.mubr.f32.mxu0 %v1013
        %1525 = vmatmul.mubr.f32.gmra.mxu0 %v1012
        %v1526 = vpop.f32.mrf.mxu0
        %v1527 = vadd.f32 %v1302, %v1526
        %v1528 = vpop.f32.mrf.mxu0
        %1529 = vmatprep.mubr.f32.mxu0 %v1017
        %1530 = vmatmul.mubr.f32.gmra.mxu0 %v1016
        %v1531 = vpop.f32.mrf.mxu0
        %v1532 = vadd.f32 %v1307, %v1531
        %v1533 = vpop.f32.mrf.mxu0
        %1534 = vmatprep.mubr.f32.mxu0 %v1021
        %1535 = vmatmul.mubr.f32.gmra.mxu0 %v1020
        %v1536 = vpop.f32.mrf.mxu0
        %v1537 = vadd.f32 %v1312, %v1536
        %v1538 = vpop.f32.mrf.mxu0
        %1539 = vmatprep.mubr.f32.mxu0 %v1025
        %1540 = vmatmul.mubr.f32.gmra.mxu0 %v1024
        %v1541 = vpop.f32.mrf.mxu0
        %v1542 = vadd.f32 %v1317, %v1541
        %v1543 = vpop.f32.mrf.mxu0
        %1544 = vmatprep.mubr.f32.mxu0 %v1029
        %1545 = vmatmul.mubr.f32.gmra.mxu0 %v1028
        %v1546 = vpop.f32.mrf.mxu0
        %v1547 = vadd.f32 %v1322, %v1546
        %v1548 = vpop.f32.mrf.mxu0
        %1549 = vmatprep.mubr.f32.mxu0 %v1033
        %1550 = vmatmul.mubr.f32.gmra.mxu0 %v1032
        %v1551 = vpop.f32.mrf.mxu0
        %v1552 = vadd.f32 %v1327, %v1551
        %v1553 = vpop.f32.mrf.mxu0
        %1554 = vdwg.mxu0
        %1555 = vst [vmem:[%s271] sm:$0xff] %v1397
        %1556 = vst [vmem:[%s271 + $0x8] sm:$0xff] %v1402
        %1557 = vst [vmem:[%s271 + $0x10] sm:$0xff] %v1407
        %1558 = vst [vmem:[%s271 + $0x18] sm:$0xff] %v1412
        %1559 = vst [vmem:[%s271 + $0x20] sm:$0xff] %v1417
        %1560 = vst [vmem:[%s271 + $0x28] sm:$0xff] %v1422
        %1561 = vst [vmem:[%s271 + $0x30] sm:$0xff] %v1427
        %1562 = vst [vmem:[%s271 + $0x38] sm:$0xff] %v1432
        %1563 = vst [vmem:[%s271 + $0x40] sm:$0xff] %v1437
        %1564 = vst [vmem:[%s271 + $0x48] sm:$0xff] %v1442
        %1565 = vst [vmem:[%s271 + $0x50] sm:$0xff] %v1447
        %1566 = vst [vmem:[%s271 + $0x58] sm:$0xff] %v1452
        %1567 = vst [vmem:[%s271 + $0x60] sm:$0xff] %v1457
        %1568 = vst [vmem:[%s271 + $0x68] sm:$0xff] %v1462
        %1569 = vst [vmem:[%s271 + $0x70] sm:$0xff] %v1467
        %1570 = vst [vmem:[%s271 + $0x78] sm:$0xff] %v1472
        %1571 = vst [vmem:[%s271 + $0x80] sm:$0xff] %v1477
        %1572 = vst [vmem:[%s271 + $0x88] sm:$0xff] %v1482
        %1573 = vst [vmem:[%s271 + $0x90] sm:$0xff] %v1487
        %1574 = vst [vmem:[%s271 + $0x98] sm:$0xff] %v1492
        %1575 = vst [vmem:[%s271 + $0xa0] sm:$0xff] %v1497
        %1576 = vst [vmem:[%s271 + $0xa8] sm:$0xff] %v1502
        %1577 = vst [vmem:[%s271 + $0xb0] sm:$0xff] %v1507
        %1578 = vst [vmem:[%s271 + $0xb8] sm:$0xff] %v1512
        %1579 = vst [vmem:[%s271 + $0xc0] sm:$0xff] %v1517
        %1580 = vst [vmem:[%s271 + $0xc8] sm:$0xff] %v1522
        %1581 = vst [vmem:[%s271 + $0xd0] sm:$0xff] %v1527
        %1582 = vst [vmem:[%s271 + $0xd8] sm:$0xff] %v1532
        %1583 = vst [vmem:[%s271 + $0xe0] sm:$0xff] %v1537
        %1584 = vst [vmem:[%s271 + $0xe8] sm:$0xff] %v1542
        %1585 = vst [vmem:[%s271 + $0xf0] sm:$0xff] %v1547
        %1586 = vst [vmem:[%s271 + $0xf8] sm:$0xff] %v1552
        %s1587 = sand.u32 %s141, 1
        %s1588 = scalar_lea.sflag [#allocation4], %s1587
        %s1589 = sand.u32 %s141, 1
        %s1590 = smul.addr %s1589, 256
        %s1591 = scalar_lea.vmem [#allocation8], %s1590
        // Predicated region
        $region53: #{positionwise_feed_forward.1} parent=39 // pred_check
          %p1592 = pneg %p151
        $region54: #{positionwise_feed_forward.1} parent=39 // pred_check_branch
          %1594 = sbr.rel (%p1592) target = $region56
        $region55: #{positionwise_feed_forward.1} parent=39 // pred_region
          %s1595 = smul.u32 32, %s23
          %s1597 = ssub.s32 4096, 4096
          %1598 = vsyncadd %s1588, %s1597
          %s1599 = smul.addr %s1595, 128
          %s1600 = scalar_lea.hbm %s5, %s1599
          %s1601 = sshll.u32 %s1591, 4
          %s1602 = int_to_ptr.vmem [resolvable:$true] %s1601
          %1607 = dma.vmem_to_hbm [thread:$0]  %s1602, 4096, %s1600, %s1588, 128, 128, 8
        $region56: #{positionwise_feed_forward.1} parent=39 // pred_fallthru
          _
      $region40: #{positionwise_feed_forward.1} parent=5 // pred_fallthru
        _
      %p1608 = scmp.le.s32.totalorder 2, %s18
      // Predicated region
      $region57: #{positionwise_feed_forward.1} parent=5 // pred_check
        %p1609 = pneg %p1608
      $region58: #{positionwise_feed_forward.1} parent=5 // pred_check_branch
        %1611 = sbr.rel (%p1609) target = $region60
      $region59: #{positionwise_feed_forward.1} parent=5 // pred_region
        %s1612 = ssub.s32 %s18, 2
        // Predicated region
        $region61: #{positionwise_feed_forward.1} parent=59 // pred_check
          %p1613 = pneg %p157
        $region62: #{positionwise_feed_forward.1} parent=59 // pred_check_branch
          %1615 = sbr.rel (%p1613) target = $region64
        $region63: #{positionwise_feed_forward.1} parent=59 // pred_region
          %s1616 = sand.u32 %s142, 1
          %s1617 = scalar_lea.sflag [#allocation4], %s1616
          %s1618 = sand.u32 %s142, 1
          %s1619 = smul.addr %s1618, 256
          %s1620 = scalar_lea.vmem [#allocation8], %s1619
          %1621 = dma.done %s1617, 4096
        $region64: #{positionwise_feed_forward.1} parent=59 // pred_fallthru
          _
      $region60: #{positionwise_feed_forward.1} parent=5 // pred_fallthru
        _
    $region6: #{positionwise_feed_forward.1} parent=1 // loop_footer
      %s22 = sadd.s32 1, %s18
    $region7: #{positionwise_feed_forward.1} parent=1 // loop_footer_branch
      %17 = sbr.rel target = $region3
    $region8: #{positionwise_feed_forward.1} parent=1 // loop_exit
      _
    %1622 = vsyncpa [#allocation3], 1
    %s1623 = scalar_lea.sflag [#allocation3], 1
    %1624 = vsyncpa %s1623, 1
    %1625 = vsyncpa [#allocation6], 1
    %1626 = vsyncpa [#allocation4], 1
    %s1627 = scalar_lea.sflag [#allocation4], 1
    %1628 = vsyncpa %s1627, 1

</llo_original>
